<compile_context>
chip_gen: v5e
topology: v5e:2x2
jax: 0.10.0
libtpu: 0.0.40
codegen_flags: <defaults>
</compile_context>

<pallas_src>
import functools

import jax
import jax.numpy as jnp
from jax.experimental import pallas as pl
from jax.experimental.pallas import tpu as pltpu

H = W = 16
HW = H * W                      # 256 spatial positions
C1, C2, C3 = 32, 16, 8          # conv channel counts
KK = 4                          # 2x2 kernel -> 4 taps


# ----------------------------------------------------------------------------
# Fused Pallas kernel: conv1 -> conv2 -> conv3 -> sigmoid -> correlation
# ----------------------------------------------------------------------------
def _net2_kernel(x_ref, w1_ref, b1_ref, w2_ref, b2_ref, w3_ref, b3_ref,
                 o_ref, *, effect):
    f32 = jnp.float32

    # Constant shift/mask matrices, shared by all three conv layers.
    # patch_off[ci, q] = sum_p a[ci, p] * S_off[p, q] = a[ci, q + off] if the
    # tap stays inside the (right/bottom zero-padded) image, else 0.
    rows = jax.lax.broadcasted_iota(jnp.int32, (HW, HW), 0)
    cols = jax.lax.broadcasted_iota(jnp.int32, (HW, HW), 1)
    not_last_col = (cols % W) != (W - 1)          # kw = 1 taps need x < 15
    s01 = ((rows == cols + 1) & not_last_col).astype(f32)       # tap (0, 1)
    s10 = (rows == cols + W).astype(f32)                        # tap (1, 0)
    s11 = ((rows == cols + (W + 1)) & not_last_col).astype(f32)  # tap (1, 1)

    def conv2x2(a, w_ref, b_ref):
        # a: (Cin, 256) channels-first, spatially flattened (p = y*16 + x)
        # w_ref: (Cout, 4*Cin), tap-major rows (tap = kh*2 + kw)
        # b_ref: (Cout, 1)
        p01 = jnp.dot(a, s01, preferred_element_type=f32)
        p10 = jnp.dot(a, s10, preferred_element_type=f32)
        p11 = jnp.dot(a, s11, preferred_element_type=f32)
        patches = jnp.concatenate([a, p01, p10, p11], axis=0)   # (4*Cin, 256)
        return jnp.dot(w_ref[...], patches,
                       preferred_element_type=f32) + b_ref[...]

    a0 = x_ref[0]                                       # (1, 256)
    a1 = conv2x2(a0, w1_ref, b1_ref)                    # (32, 256)
    a2 = conv2x2(a1, w2_ref, b2_ref)                    # (16, 256)
    a3 = jax.nn.sigmoid(conv2x2(a2, w3_ref, b3_ref))    # (8, 256)

    # Per-spatial-position correlation across the 8 channels.
    c = a3 - jnp.mean(a3, axis=0, keepdims=True)        # centered, (8, 256)
    mid = jnp.sum(c * c, axis=0, keepdims=True)         # (1, 256)
    cn = c / jnp.sqrt(mid)                              # column-normalized
    corr = jnp.dot(cn.T, cn, preferred_element_type=f32)  # (256, 256)
    if effect != 1.0:
        corr = corr * effect
    o_ref[0] = corr


def net2_forward(x, params, effect=1.0):
    """x: (B, 16, 16) image batch -> (B, 256, 256) correlation matrices."""
    B = x.shape[0]
    x3 = x.astype(jnp.float32).reshape(B, 1, HW)        # channels-first, flat
    kern = functools.partial(_net2_kernel, effect=float(effect))
    return pl.pallas_call(
        kern,
        out_shape=jax.ShapeDtypeStruct((B, HW, HW), jnp.float32),
        grid=(B,),
        in_specs=[
            pl.BlockSpec((1, 1, HW), lambda b: (b, 0, 0)),
            pl.BlockSpec((C1, KK * 1), lambda b: (0, 0)),
            pl.BlockSpec((C1, 1), lambda b: (0, 0)),
            pl.BlockSpec((C2, KK * C1), lambda b: (0, 0)),
            pl.BlockSpec((C2, 1), lambda b: (0, 0)),
            pl.BlockSpec((C3, KK * C2), lambda b: (0, 0)),
            pl.BlockSpec((C3, 1), lambda b: (0, 0)),
        ],
        out_specs=pl.BlockSpec((1, HW, HW), lambda b: (b, 0, 0)),
        compiler_params=pltpu.CompilerParams(
            dimension_semantics=("parallel",)),
    )(x3, params["w1_2d"], params["b1_col"],
      params["w2_2d"], params["b2_col"],
      params["w3_2d"], params["b3_col"])


# ----------------------------------------------------------------------------
# Parameter init (deterministic; PyTorch-style uniform(-1/sqrt(fan_in), ...))
# ----------------------------------------------------------------------------
def init_params(key):
    ks = jax.random.split(key, 6)

    def conv_init(kw_, kb_, cout, cin, k=2):
        s = 1.0 / float(cin * k * k) ** 0.5
        w = jax.random.uniform(kw_, (cout, cin, k, k), jnp.float32, -s, s)
        b = jax.random.uniform(kb_, (cout,), jnp.float32, -s, s)
        return w, b

    p = {}
    for i, (name, cout, cin) in enumerate([("1", C1, 1), ("2", C2, C1),
                                           ("3", C3, C2)]):
        w, b = conv_init(ks[2 * i], ks[2 * i + 1], cout, cin)
        p[f"w{name}_oihw"] = w                                   # PyTorch layout
        # (Cout,Cin,kh,kw) -> (Cout,kh,kw,Cin) -> (Cout, 4*Cin): rows tap-major,
        # matching the in-kernel patch matrix [tap00; tap01; tap10; tap11].
        p[f"w{name}_2d"] = jnp.transpose(w, (0, 2, 3, 1)).reshape(cout, 4 * cin)
        p[f"b{name}"] = b
        p[f"b{name}_col"] = b.reshape(cout, 1)
    return p


# ----------------------------------------------------------------------------
# Pure-JAX reference (literal translation of the PyTorch forward)
# ----------------------------------------------------------------------------
def reference_forward(x, params, effect=1.0):
    B = x.shape[0]
    h = x.reshape(B, 1, H, W).astype(jnp.float32)        # convert2twod

    def pad_rb(a):                                       # pad=(0,1,0,1)
        return jnp.pad(a, ((0, 0), (0, 0), (0, 1), (0, 1)))

    def conv(a, w, b):
        o = jax.lax.conv_general_dilated(
            a, w, window_strides=(1, 1), padding=[(0, 0), (0, 0)],
            dimension_numbers=("NCHW", "OIHW", "NCHW"))
        return o + b.reshape(1, -1, 1, 1)

    h = conv(pad_rb(h), params["w1_oihw"], params["b1"])
    h = conv(pad_rb(h), params["w2_oihw"], params["b2"])
    out = jax.nn.sigmoid(conv(pad_rb(h), params["w3_oihw"], params["b3"]))
    out = out.reshape(B, C3, HW)
    out = out - jnp.mean(out, axis=1, keepdims=True)
    cov = jnp.einsum("bcp,bcq->bpq", out, out)
    mid = jnp.sum(out ** 2, axis=1, keepdims=True)       # (B, 1, 256)
    std = jnp.sqrt(jnp.einsum("bip,biq->bpq", mid, mid))
    return (cov / std) * effect


# ----------------------------------------------------------------------------
if __name__ == "__main__":
    B = 2
    x = jax.random.normal(jax.random.PRNGKey(0), (B, H, W), dtype=jnp.float32)
    params = init_params(jax.random.PRNGKey(42))

    fwd = jax.jit(lambda xx: net2_forward(xx, params))
    out = fwd(x)
    jax.block_until_ready(out)

    assert out.shape == (B, HW, HW), out.shape

    ref = reference_forward(x, params)
    max_err = float(jnp.max(jnp.abs(out - ref)))
    assert jnp.allclose(out, ref, atol=5e-3, rtol=5e-3), max_err

    print("KERNEL_OK")
</pallas_src>

<mosaic_0001>
module attributes {stable_mosaic.version = 11 : i64} {
  func.func @_net2_kernel(%arg0: i32, %arg1: memref<1x1x256xf32, #tpu.memory_space<vmem>>, %arg2: memref<32x4xf32, #tpu.memory_space<vmem>>, %arg3: memref<32x1xf32, #tpu.memory_space<vmem>>, %arg4: memref<16x128xf32, #tpu.memory_space<vmem>>, %arg5: memref<16x1xf32, #tpu.memory_space<vmem>>, %arg6: memref<8x64xf32, #tpu.memory_space<vmem>>, %arg7: memref<8x1xf32, #tpu.memory_space<vmem>>, %arg8: memref<1x256x256xf32, #tpu.memory_space<vmem>>) attributes {dimension_semantics = [#tpu.dimension_semantics<parallel>], iteration_bounds = array<i64: 2>, scalar_prefetch = 0 : i64, scratch_operands = 0 : i64, tpu.core_type = #tpu.core_type<tc>, window_params = [{transform_indices = @transform_0, window_bounds = array<i64: 1, 1, 256>}, {pipeline_mode = #tpu.pipeline_mode<synchronous>, transform_indices = @transform_1, window_bounds = array<i64: 32, 4>}, {pipeline_mode = #tpu.pipeline_mode<synchronous>, transform_indices = @transform_2, window_bounds = array<i64: 32, 1>}, {pipeline_mode = #tpu.pipeline_mode<synchronous>, transform_indices = @transform_3, window_bounds = array<i64: 16, 128>}, {pipeline_mode = #tpu.pipeline_mode<synchronous>, transform_indices = @transform_4, window_bounds = array<i64: 16, 1>}, {pipeline_mode = #tpu.pipeline_mode<synchronous>, transform_indices = @transform_5, window_bounds = array<i64: 8, 64>}, {pipeline_mode = #tpu.pipeline_mode<synchronous>, transform_indices = @transform_6, window_bounds = array<i64: 8, 1>}, {transform_indices = @transform_7, window_bounds = array<i64: 1, 256, 256>}]} {
    %0 = tpu.iota {dimensions = array<i32: 0>} : vector<256x256xi32>
    %1 = tpu.iota {dimensions = array<i32: 1>} : vector<256x256xi32>
    %c16_i32 = arith.constant 16 : i32
    %c0_i32 = arith.constant 0 : i32
    %2 = arith.cmpi eq, %c16_i32, %c0_i32 : i32
    %c1_i32 = arith.constant 1 : i32
    %3 = arith.select %2, %c1_i32, %c16_i32 : i32
    %4 = vector.broadcast %3 : i32 to vector<256x256xi32>
    %5 = arith.remsi %1, %4 : vector<256x256xi32>
    %c0_i32_0 = arith.constant 0 : i32
    %6 = vector.broadcast %c0_i32_0 : i32 to vector<256x256xi32>
    %7 = arith.cmpi ne, %5, %6 : vector<256x256xi32>
    %c0_i32_1 = arith.constant 0 : i32
    %8 = vector.broadcast %c0_i32_1 : i32 to vector<256x256xi32>
    %9 = arith.cmpi slt, %5, %8 : vector<256x256xi32>
    %c0_i32_2 = arith.constant 0 : i32
    %10 = arith.cmpi slt, %3, %c0_i32_2 : i32
    %11 = vector.broadcast %10 : i1 to vector<256x256xi1>
    %12 = vector.broadcast %11 : vector<256x256xi1> to vector<256x256xi1>
    %13 = arith.xori %9, %12 : vector<256x256xi1>
    %14 = arith.andi %13, %7 : vector<256x256xi1>
    %15 = vector.broadcast %3 : i32 to vector<256x256xi32>
    %16 = arith.addi %5, %15 : vector<256x256xi32>
    %17 = arith.select %14, %16, %5 : vector<256x256xi1>, vector<256x256xi32>
    %c15_i32 = arith.constant 15 : i32
    %18 = vector.broadcast %c15_i32 : i32 to vector<256x256xi32>
    %19 = arith.cmpi ne, %17, %18 : vector<256x256xi32>
    %c1_i32_3 = arith.constant 1 : i32
    %20 = vector.broadcast %c1_i32_3 : i32 to vector<256x256xi32>
    %21 = arith.addi %1, %20 : vector<256x256xi32>
    %22 = arith.cmpi eq, %0, %21 : vector<256x256xi32>
    %23 = arith.andi %22, %19 : vector<256x256xi1>
    %24 = arith.extui %23 : vector<256x256xi1> to vector<256x256xi32>
    %25 = arith.sitofp %24 : vector<256x256xi32> to vector<256x256xf32>
    %c16_i32_4 = arith.constant 16 : i32
    %26 = vector.broadcast %c16_i32_4 : i32 to vector<256x256xi32>
    %27 = arith.addi %1, %26 : vector<256x256xi32>
    %28 = arith.cmpi eq, %0, %27 : vector<256x256xi32>
    %29 = arith.extui %28 : vector<256x256xi1> to vector<256x256xi32>
    %30 = arith.sitofp %29 : vector<256x256xi32> to vector<256x256xf32>
    %c17_i32 = arith.constant 17 : i32
    %31 = vector.broadcast %c17_i32 : i32 to vector<256x256xi32>
    %32 = arith.addi %1, %31 : vector<256x256xi32>
    %33 = arith.cmpi eq, %0, %32 : vector<256x256xi32>
    %34 = arith.andi %33, %19 : vector<256x256xi1>
    %35 = arith.extui %34 : vector<256x256xi1> to vector<256x256xi32>
    %36 = arith.sitofp %35 : vector<256x256xi32> to vector<256x256xf32>
    %c0 = arith.constant 0 : index
    %c0_5 = arith.constant 0 : index
    %c0_6 = arith.constant 0 : index
    %37 = vector.load %arg1[%c0, %c0_5, %c0_6] : memref<1x1x256xf32, #tpu.memory_space<vmem>>, vector<1x1x256xf32>
    %38 = vector.shape_cast %37 : vector<1x1x256xf32> to vector<1x256xf32>
    %cst = arith.constant dense<0.000000e+00> : vector<1x256xf32>
    %39 = tpu.matmul %38, %25, %cst {dimension_numbers = #tpu.dot_dimension_numbers<[1], [0], [0], [1], [0, 0, 1, 1], [], []>} : vector<1x256xf32>, vector<256x256xf32>, vector<1x256xf32> -> vector<1x256xf32>
    %cst_7 = arith.constant dense<0.000000e+00> : vector<1x256xf32>
    %40 = tpu.matmul %38, %30, %cst_7 {dimension_numbers = #tpu.dot_dimension_numbers<[1], [0], [0], [1], [0, 0, 1, 1], [], []>} : vector<1x256xf32>, vector<256x256xf32>, vector<1x256xf32> -> vector<1x256xf32>
    %cst_8 = arith.constant dense<0.000000e+00> : vector<1x256xf32>
    %41 = tpu.matmul %38, %36, %cst_8 {dimension_numbers = #tpu.dot_dimension_numbers<[1], [0], [0], [1], [0, 0, 1, 1], [], []>} : vector<1x256xf32>, vector<256x256xf32>, vector<1x256xf32> -> vector<1x256xf32>
    %42 = tpu.concatenate %38, %39, %40, %41 in 0 : vector<1x256xf32>, vector<1x256xf32>, vector<1x256xf32>, vector<1x256xf32> -> vector<4x256xf32>
    %c0_9 = arith.constant 0 : index
    %c0_10 = arith.constant 0 : index
    %43 = vector.load %arg2[%c0_9, %c0_10] : memref<32x4xf32, #tpu.memory_space<vmem>>, vector<32x4xf32>
    %cst_11 = arith.constant dense<0.000000e+00> : vector<32x256xf32>
    %44 = tpu.matmul %43, %42, %cst_11 {dimension_numbers = #tpu.dot_dimension_numbers<[1], [0], [0], [1], [0, 0, 1, 1], [], []>} : vector<32x4xf32>, vector<4x256xf32>, vector<32x256xf32> -> vector<32x256xf32>
    %c0_12 = arith.constant 0 : index
    %c0_13 = arith.constant 0 : index
    %45 = vector.load %arg3[%c0_12, %c0_13] : memref<32x1xf32, #tpu.memory_space<vmem>>, vector<32x1xf32>
    %46 = vector.broadcast %45 : vector<32x1xf32> to vector<32x256xf32>
    %47 = arith.addf %44, %46 : vector<32x256xf32>
    %cst_14 = arith.constant dense<0.000000e+00> : vector<32x256xf32>
    %48 = tpu.matmul %47, %25, %cst_14 {dimension_numbers = #tpu.dot_dimension_numbers<[1], [0], [0], [1], [0, 0, 1, 1], [], []>} : vector<32x256xf32>, vector<256x256xf32>, vector<32x256xf32> -> vector<32x256xf32>
    %cst_15 = arith.constant dense<0.000000e+00> : vector<32x256xf32>
    %49 = tpu.matmul %47, %30, %cst_15 {dimension_numbers = #tpu.dot_dimension_numbers<[1], [0], [0], [1], [0, 0, 1, 1], [], []>} : vector<32x256xf32>, vector<256x256xf32>, vector<32x256xf32> -> vector<32x256xf32>
    %cst_16 = arith.constant dense<0.000000e+00> : vector<32x256xf32>
    %50 = tpu.matmul %47, %36, %cst_16 {dimension_numbers = #tpu.dot_dimension_numbers<[1], [0], [0], [1], [0, 0, 1, 1], [], []>} : vector<32x256xf32>, vector<256x256xf32>, vector<32x256xf32> -> vector<32x256xf32>
    %51 = tpu.concatenate %47, %48, %49, %50 in 0 : vector<32x256xf32>, vector<32x256xf32>, vector<32x256xf32>, vector<32x256xf32> -> vector<128x256xf32>
    %c0_17 = arith.constant 0 : index
    %c0_18 = arith.constant 0 : index
    %52 = vector.load %arg4[%c0_17, %c0_18] : memref<16x128xf32, #tpu.memory_space<vmem>>, vector<16x128xf32>
    %cst_19 = arith.constant dense<0.000000e+00> : vector<16x256xf32>
    %53 = tpu.matmul %52, %51, %cst_19 {dimension_numbers = #tpu.dot_dimension_numbers<[1], [0], [0], [1], [0, 0, 1, 1], [], []>} : vector<16x128xf32>, vector<128x256xf32>, vector<16x256xf32> -> vector<16x256xf32>
    %c0_20 = arith.constant 0 : index
    %c0_21 = arith.constant 0 : index
    %54 = vector.load %arg5[%c0_20, %c0_21] : memref<16x1xf32, #tpu.memory_space<vmem>>, vector<16x1xf32>
    %55 = vector.broadcast %54 : vector<16x1xf32> to vector<16x256xf32>
    %56 = arith.addf %53, %55 : vector<16x256xf32>
    %cst_22 = arith.constant dense<0.000000e+00> : vector<16x256xf32>
    %57 = tpu.matmul %56, %25, %cst_22 {dimension_numbers = #tpu.dot_dimension_numbers<[1], [0], [0], [1], [0, 0, 1, 1], [], []>} : vector<16x256xf32>, vector<256x256xf32>, vector<16x256xf32> -> vector<16x256xf32>
    %cst_23 = arith.constant dense<0.000000e+00> : vector<16x256xf32>
    %58 = tpu.matmul %56, %30, %cst_23 {dimension_numbers = #tpu.dot_dimension_numbers<[1], [0], [0], [1], [0, 0, 1, 1], [], []>} : vector<16x256xf32>, vector<256x256xf32>, vector<16x256xf32> -> vector<16x256xf32>
    %cst_24 = arith.constant dense<0.000000e+00> : vector<16x256xf32>
    %59 = tpu.matmul %56, %36, %cst_24 {dimension_numbers = #tpu.dot_dimension_numbers<[1], [0], [0], [1], [0, 0, 1, 1], [], []>} : vector<16x256xf32>, vector<256x256xf32>, vector<16x256xf32> -> vector<16x256xf32>
    %60 = tpu.concatenate %56, %57, %58, %59 in 0 : vector<16x256xf32>, vector<16x256xf32>, vector<16x256xf32>, vector<16x256xf32> -> vector<64x256xf32>
    %c0_25 = arith.constant 0 : index
    %c0_26 = arith.constant 0 : index
    %61 = vector.load %arg6[%c0_25, %c0_26] : memref<8x64xf32, #tpu.memory_space<vmem>>, vector<8x64xf32>
    %cst_27 = arith.constant dense<0.000000e+00> : vector<8x256xf32>
    %62 = tpu.matmul %61, %60, %cst_27 {dimension_numbers = #tpu.dot_dimension_numbers<[1], [0], [0], [1], [0, 0, 1, 1], [], []>} : vector<8x64xf32>, vector<64x256xf32>, vector<8x256xf32> -> vector<8x256xf32>
    %c0_28 = arith.constant 0 : index
    %c0_29 = arith.constant 0 : index
    %63 = vector.load %arg7[%c0_28, %c0_29] : memref<8x1xf32, #tpu.memory_space<vmem>>, vector<8x1xf32>
    %64 = vector.broadcast %63 : vector<8x1xf32> to vector<8x256xf32>
    %65 = arith.addf %62, %64 : vector<8x256xf32>
    %66 = arith.negf %65 : vector<8x256xf32>
    %67 = math.exp %66 : vector<8x256xf32>
    %cst_30 = arith.constant 1.000000e+00 : f32
    %68 = vector.broadcast %cst_30 : f32 to vector<8x256xf32>
    %69 = arith.addf %68, %67 : vector<8x256xf32>
    %70 = arith.divf %68, %69 : vector<8x256xf32>
    %cst_31 = arith.constant dense<0.000000e+00> : vector<256xf32>
    %71 = vector.multi_reduction <add>, %70, %cst_31 [0] : vector<8x256xf32> to vector<256xf32>
    %72 = vector.shape_cast %71 : vector<256xf32> to vector<1x256xf32>
    %cst_32 = arith.constant 8.000000e+00 : f32
    %73 = vector.broadcast %cst_32 : f32 to vector<1x256xf32>
    %74 = arith.divf %72, %73 : vector<1x256xf32>
    %75 = vector.broadcast %74 : vector<1x256xf32> to vector<8x256xf32>
    %76 = arith.subf %70, %75 : vector<8x256xf32>
    %77 = arith.mulf %76, %76 : vector<8x256xf32>
    %cst_33 = arith.constant dense<0.000000e+00> : vector<256xf32>
    %78 = vector.multi_reduction <add>, %77, %cst_33 [0] : vector<8x256xf32> to vector<256xf32>
    %79 = vector.shape_cast %78 : vector<256xf32> to vector<1x256xf32>
    %80 = math.sqrt %79 : vector<1x256xf32>
    %81 = vector.broadcast %80 : vector<1x256xf32> to vector<8x256xf32>
    %82 = arith.divf %76, %81 : vector<8x256xf32>
    %83 = tpu.transpose %82, [1, 0] : vector<8x256xf32> -> vector<256x8xf32>
    %cst_34 = arith.constant dense<0.000000e+00> : vector<256x256xf32>
    %84 = tpu.matmul %83, %82, %cst_34 {dimension_numbers = #tpu.dot_dimension_numbers<[1], [0], [0], [1], [0, 0, 1, 1], [], []>} : vector<256x8xf32>, vector<8x256xf32>, vector<256x256xf32> -> vector<256x256xf32>
    %c0_35 = arith.constant 0 : index
    %c0_36 = arith.constant 0 : index
    %c0_37 = arith.constant 0 : index
    %85 = vector.load %arg8[%c0_35, %c0_36, %c0_37] : memref<1x256x256xf32, #tpu.memory_space<vmem>>, vector<1x256x256xf32>
    %86 = vector.shape_cast %85 : vector<1x256x256xf32> to vector<256x256xf32>
    %87 = vector.shape_cast %84 : vector<256x256xf32> to vector<1x256x256xf32>
    tpu.vector_store %arg8[%c0_35, %c0_36, %c0_37], %87 {strides = array<i32>} : memref<1x256x256xf32, #tpu.memory_space<vmem>>, vector<1x256x256xf32>,
    return
  }
  func.func @transform_0(%arg0: i32) -> (i32, i32, i32) {
    %c0_i32 = arith.constant 0 : i32
    %c0_i32_0 = arith.constant 0 : i32
    %c0_i32_1 = arith.constant 0 : i32
    return %arg0, %c0_i32, %c0_i32_0 : i32, i32, i32
  }
  func.func @transform_1(%arg0: i32) -> (i32, i32) {
    %c0_i32 = arith.constant 0 : i32
    %c0_i32_0 = arith.constant 0 : i32
    %c0_i32_1 = arith.constant 0 : i32
    return %c0_i32, %c0_i32_0 : i32, i32
  }
  func.func @transform_2(%arg0: i32) -> (i32, i32) {
    %c0_i32 = arith.constant 0 : i32
    %c0_i32_0 = arith.constant 0 : i32
    %c0_i32_1 = arith.constant 0 : i32
    return %c0_i32, %c0_i32_0 : i32, i32
  }
  func.func @transform_3(%arg0: i32) -> (i32, i32) {
    %c0_i32 = arith.constant 0 : i32
    %c0_i32_0 = arith.constant 0 : i32
    %c0_i32_1 = arith.constant 0 : i32
    return %c0_i32, %c0_i32_0 : i32, i32
  }
  func.func @transform_4(%arg0: i32) -> (i32, i32) {
    %c0_i32 = arith.constant 0 : i32
    %c0_i32_0 = arith.constant 0 : i32
    %c0_i32_1 = arith.constant 0 : i32
    return %c0_i32, %c0_i32_0 : i32, i32
  }
  func.func @transform_5(%arg0: i32) -> (i32, i32) {
    %c0_i32 = arith.constant 0 : i32
    %c0_i32_0 = arith.constant 0 : i32
    %c0_i32_1 = arith.constant 0 : i32
    return %c0_i32, %c0_i32_0 : i32, i32
  }
  func.func @transform_6(%arg0: i32) -> (i32, i32) {
    %c0_i32 = arith.constant 0 : i32
    %c0_i32_0 = arith.constant 0 : i32
    %c0_i32_1 = arith.constant 0 : i32
    return %c0_i32, %c0_i32_0 : i32, i32
  }
  func.func @transform_7(%arg0: i32) -> (i32, i32, i32) {
    %c0_i32 = arith.constant 0 : i32
    %c0_i32_0 = arith.constant 0 : i32
    %c0_i32_1 = arith.constant 0 : i32
    return %arg0, %c0_i32, %c0_i32_0 : i32, i32, i32
  }
}

</mosaic_0001>

<llo_original>
// kernel: _lambda_.1
$region0: #{_lambda_.1}
  #allocation0 [shape = 'u32[]', space=smem, size = 0x4, offset = 0x4, fixed_abs, tag = 'smem constant byte address 0x4 - core index']
  #allocation1 [shape = 'u32[72,128]{1,0:T(1,128)}', space=vmem, size = 0x9000, scoped, tag = 'internal scratch']
  %s0 = inlined_call_operand.vmem [shape: f32[2,1,256], index: 0, kind: input, shape index: {}]
  %s1 = inlined_call_operand.hbm [shape: f32[32,4], index: 1, kind: input, shape index: {}]
  %s2 = inlined_call_operand.vmem [shape: f32[32,1], index: 2, kind: input, shape index: {}]
  %s3 = inlined_call_operand.hbm [shape: f32[16,128], index: 3, kind: input, shape index: {}]
  %s4 = inlined_call_operand.hbm [shape: f32[16,1], index: 4, kind: input, shape index: {}]
  %s5 = inlined_call_operand.hbm [shape: f32[8,64], index: 5, kind: input, shape index: {}]
  %s6 = inlined_call_operand.vmem [shape: f32[8,1], index: 6, kind: input, shape index: {}]
  %s7 = inlined_call_operand.hbm [shape: f32[2,256,256], index: 7, kind: output, shape index: {}]
  %s8 = sld [smem:[#allocation0]]
  $region77: #{_lambda_.1} parent=0
    _
  %s10 = ssub.s32 1, %s8
  %s11 = scalar_select 0, %s10, %s8
  $region1: #{_lambda_.1} parent=0
    #allocation2 [shape = 'u8[16384]{0}', space=vmem, size = 0x4000, scoped, tag = 'input window, operand 1, single buffered']
    #allocation3 [shape = 's32[2]{0}', space=sflag, size = 0x8, scoped, tag = 'scoped memory for _lambda_.1']
    #allocation4 [shape = 's32[2]{0}', space=sflag, size = 0x8, scoped, tag = 'scoped memory for _lambda_.1']
    #allocation5 [shape = 'u8[8192]{0}', space=vmem, size = 0x2000, scoped, tag = 'input window, operand 3, single buffered']
    #allocation6 [shape = 's32[1]{0}', space=sflag, size = 0x4, scoped, tag = 'scoped memory for _lambda_.1']
    #allocation7 [shape = 'u8[8192]{0}', space=vmem, size = 0x2000, scoped, tag = 'input window, operand 4, single buffered']
    #allocation8 [shape = 'u8[4096]{0}', space=vmem, size = 0x1000, scoped, tag = 'input window, operand 5, single buffered']
    #allocation9 [shape = 's32[1]{0}', space=sflag, size = 0x4, scoped, tag = 'scoped memory for _lambda_.1']
    #allocation10 [shape = 'u8[524288]{0}', space=vmem, size = 0x80000, scoped, tag = 'output window, operand 0']
    %12 = vsyncpa [#allocation3], 0
    %13 = vsyncpa [#allocation6], 0
    %14 = vsyncpa [#allocation9], 0
    %15 = vsyncpa [#allocation4], 0
    %s16 = scalar_lea.sflag [#allocation4], 1
    %17 = vsyncpa %s16, 0
    loop: start=0, step=1, limit=4
    $region2: #{_lambda_.1} parent=1 // loop_pre_header
      _
    $region3: #{_lambda_.1} parent=1 // loop_header
      %s19 = sphi 0, %s23
      %p20 = scmp.ge.s32.totalorder %s19, 4
      %s29 = sphi 0, %s31
      %s32 = sphi 0, %s29
      %s33 = sphi 0, %s32
      %s49 = sphi 0, %s33
      %s53 = sphi 0, %s53
      %s55 = sphi 0, %s53
      %s56 = sphi 0, %s55
      %s70 = sphi 0, %s56
      %s74 = sphi 0, %s74
      %s76 = sphi 0, %s74
      %s77 = sphi 0, %s76
      %s91 = sphi 0, %s77
      %s95 = sphi 0, %s95
      %s97 = sphi 0, %s95
      %s98 = sphi 0, %s97
      %s112 = sphi 0, %s98
      %s116 = sphi 0, %s116
      %s118 = sphi 0, %s116
      %s119 = sphi 0, %s118
      %s133 = sphi 0, %s119
      %s137 = sphi 0, %s137
      %s139 = sphi 0, %s137
      %s140 = sphi 0, %s139
      %s154 = sphi 0, %s140
      %s158 = sphi 0, %s158
      %s160 = sphi 0, %s158
      %s161 = sphi 0, %s160
      %s175 = sphi 0, %s161
      %s181 = sphi 0, %s183
      %s184 = sphi 0, %s181
      %s185 = sphi 0, %s184
      %s201 = sphi 0, %s185
    $region4: #{_lambda_.1} parent=1 // loop_header_branch
      %22 = sbr.rel (%p20) target = $region8
    $region5: #{_lambda_.1} parent=1 // loop_body
      %s24 = ssub.s32 %s19, 1
      %s25 = ssub.s32 %s19, 2
      %s26 = sadd.s32 %s19, 1
      %s27 = ssub.s32 %s19, %s26
      %p28 = scmp.eq.s32.totalorder %s27, 0
      %s30 = sadd.s32 %s29, 1
      %s31 = scalar_select %p28, %s29, %s30
      %p34 = pneg %p28
      %p35 = scmp.eq.s32.totalorder %s19, 1
      %p36 = por %p34, %p35
      %p37 = scmp.ne.s32.totalorder %s29, %s32
      %p38 = scmp.eq.s32.totalorder %s19, 0
      %p39 = por %p37, %p38
      %p40 = scmp.ne.s32.totalorder %s29, %s32
      %p41 = scmp.eq.s32.totalorder %s24, 1
      %p42 = por %p40, %p41
      %p43 = scmp.ne.s32.totalorder %s32, %s33
      %p44 = scmp.eq.s32.totalorder %s24, 0
      %p45 = por %p43, %p44
      %p46 = scmp.ne.s32.totalorder %s32, %s33
      %p47 = scmp.eq.s32.totalorder %s25, 1
      %p48 = por %p46, %p47
      %p50 = scmp.ne.s32.totalorder %s33, %s49
      %p51 = scmp.eq.s32.totalorder %s25, 0
      %p52 = por %p50, %p51
      %s54 = sadd.s32 %s53, 1
      %p57 = scmp.eq.s32.totalorder %s19, 1
      %p58 = scmp.ne.s32.totalorder %s53, %s55
      %p59 = scmp.eq.s32.totalorder %s19, 0
      %p60 = por %p58, %p59
      %p61 = scmp.ne.s32.totalorder %s53, %s55
      %p62 = scmp.eq.s32.totalorder %s24, 1
      %p63 = por %p61, %p62
      %p64 = scmp.ne.s32.totalorder %s55, %s56
      %p65 = scmp.eq.s32.totalorder %s24, 0
      %p66 = por %p64, %p65
      %p67 = scmp.ne.s32.totalorder %s55, %s56
      %p68 = scmp.eq.s32.totalorder %s25, 1
      %p69 = por %p67, %p68
      %p71 = scmp.ne.s32.totalorder %s56, %s70
      %p72 = scmp.eq.s32.totalorder %s25, 0
      %p73 = por %p71, %p72
      %s75 = sadd.s32 %s74, 1
      %p78 = scmp.eq.s32.totalorder %s19, 1
      %p79 = scmp.ne.s32.totalorder %s74, %s76
      %p80 = scmp.eq.s32.totalorder %s19, 0
      %p81 = por %p79, %p80
      %p82 = scmp.ne.s32.totalorder %s74, %s76
      %p83 = scmp.eq.s32.totalorder %s24, 1
      %p84 = por %p82, %p83
      %p85 = scmp.ne.s32.totalorder %s76, %s77
      %p86 = scmp.eq.s32.totalorder %s24, 0
      %p87 = por %p85, %p86
      %p88 = scmp.ne.s32.totalorder %s76, %s77
      %p89 = scmp.eq.s32.totalorder %s25, 1
      %p90 = por %p88, %p89
      %p92 = scmp.ne.s32.totalorder %s77, %s91
      %p93 = scmp.eq.s32.totalorder %s25, 0
      %p94 = por %p92, %p93
      %s96 = sadd.s32 %s95, 1
      %p99 = scmp.eq.s32.totalorder %s19, 1
      %p100 = scmp.ne.s32.totalorder %s95, %s97
      %p101 = scmp.eq.s32.totalorder %s19, 0
      %p102 = por %p100, %p101
      %p103 = scmp.ne.s32.totalorder %s95, %s97
      %p104 = scmp.eq.s32.totalorder %s24, 1
      %p105 = por %p103, %p104
      %p106 = scmp.ne.s32.totalorder %s97, %s98
      %p107 = scmp.eq.s32.totalorder %s24, 0
      %p108 = por %p106, %p107
      %p109 = scmp.ne.s32.totalorder %s97, %s98
      %p110 = scmp.eq.s32.totalorder %s25, 1
      %p111 = por %p109, %p110
      %p113 = scmp.ne.s32.totalorder %s98, %s112
      %p114 = scmp.eq.s32.totalorder %s25, 0
      %p115 = por %p113, %p114
      %s117 = sadd.s32 %s116, 1
      %p120 = scmp.eq.s32.totalorder %s19, 1
      %p121 = scmp.ne.s32.totalorder %s116, %s118
      %p122 = scmp.eq.s32.totalorder %s19, 0
      %p123 = por %p121, %p122
      %p124 = scmp.ne.s32.totalorder %s116, %s118
      %p125 = scmp.eq.s32.totalorder %s24, 1
      %p126 = por %p124, %p125
      %p127 = scmp.ne.s32.totalorder %s118, %s119
      %p128 = scmp.eq.s32.totalorder %s24, 0
      %p129 = por %p127, %p128
      %p130 = scmp.ne.s32.totalorder %s118, %s119
      %p131 = scmp.eq.s32.totalorder %s25, 1
      %p132 = por %p130, %p131
      %p134 = scmp.ne.s32.totalorder %s119, %s133
      %p135 = scmp.eq.s32.totalorder %s25, 0
      %p136 = por %p134, %p135
      %s138 = sadd.s32 %s137, 1
      %p141 = scmp.eq.s32.totalorder %s19, 1
      %p142 = scmp.ne.s32.totalorder %s137, %s139
      %p143 = scmp.eq.s32.totalorder %s19, 0
      %p144 = por %p142, %p143
      %p145 = scmp.ne.s32.totalorder %s137, %s139
      %p146 = scmp.eq.s32.totalorder %s24, 1
      %p147 = por %p145, %p146
      %p148 = scmp.ne.s32.totalorder %s139, %s140
      %p149 = scmp.eq.s32.totalorder %s24, 0
      %p150 = por %p148, %p149
      %p151 = scmp.ne.s32.totalorder %s139, %s140
      %p152 = scmp.eq.s32.totalorder %s25, 1
      %p153 = por %p151, %p152
      %p155 = scmp.ne.s32.totalorder %s140, %s154
      %p156 = scmp.eq.s32.totalorder %s25, 0
      %p157 = por %p155, %p156
      %s159 = sadd.s32 %s158, 1
      %p162 = scmp.eq.s32.totalorder %s19, 1
      %p163 = scmp.ne.s32.totalorder %s158, %s160
      %p164 = scmp.eq.s32.totalorder %s19, 0
      %p165 = por %p163, %p164
      %p166 = scmp.ne.s32.totalorder %s158, %s160
      %p167 = scmp.eq.s32.totalorder %s24, 1
      %p168 = por %p166, %p167
      %p169 = scmp.ne.s32.totalorder %s160, %s161
      %p170 = scmp.eq.s32.totalorder %s24, 0
      %p171 = por %p169, %p170
      %p172 = scmp.ne.s32.totalorder %s160, %s161
      %p173 = scmp.eq.s32.totalorder %s25, 1
      %p174 = por %p172, %p173
      %p176 = scmp.ne.s32.totalorder %s161, %s175
      %p177 = scmp.eq.s32.totalorder %s25, 0
      %p178 = por %p176, %p177
      %s179 = ssub.s32 %s19, %s26
      %p180 = scmp.eq.s32.totalorder %s179, 0
      %s182 = sadd.s32 %s181, 1
      %s183 = scalar_select %p180, %s181, %s182
      %p186 = pneg %p180
      %p187 = scmp.eq.s32.totalorder %s19, 1
      %p188 = por %p186, %p187
      %p189 = scmp.ne.s32.totalorder %s181, %s184
      %p190 = scmp.eq.s32.totalorder %s19, 0
      %p191 = por %p189, %p190
      %p192 = scmp.ne.s32.totalorder %s181, %s184
      %p193 = scmp.eq.s32.totalorder %s24, 1
      %p194 = por %p192, %p193
      %p195 = scmp.ne.s32.totalorder %s184, %s185
      %p196 = scmp.eq.s32.totalorder %s24, 0
      %p197 = por %p195, %p196
      %p198 = scmp.ne.s32.totalorder %s184, %s185
      %p199 = scmp.eq.s32.totalorder %s25, 1
      %p200 = por %p198, %p199
      %p202 = scmp.ne.s32.totalorder %s185, %s201
      %p203 = scmp.eq.s32.totalorder %s25, 0
      %p204 = por %p202, %p203
      %p205 = scmp.le.s32.totalorder 1, %s19
      %p206 = scmp.lt.s32.totalorder %s19, 3
      %p207 = pnand %p205, %p206
      %p208 = pneg %p207
      // Predicated region
      $region9: #{_lambda_.1} parent=5 // pred_check
        _
      $region10: #{_lambda_.1} parent=5 // pred_check_branch
        %210 = sbr.rel (%p207) target = $region12
      $region11: #{_lambda_.1} parent=5 // pred_region
        %s211 = ssub.s32 %s19, 1
        // Predicated region
        $region13: #{_lambda_.1} parent=11 // pred_check
          %p212 = pneg %p66
        $region14: #{_lambda_.1} parent=11 // pred_check_branch
          %214 = sbr.rel (%p212) target = $region16
        $region15: #{_lambda_.1} parent=11 // pred_region
          %216 = vsyncadd [#allocation3], 0
          %s217 = sshll.u32 %s1, 4
          %s218 = int_to_ptr.hbm [resolvable:$true] %s217
          %s219 = sshll.u32 [#allocation2], 4
          %s220 = int_to_ptr.vmem [resolvable:$true] %s219
          %225 = dma.hbm_to_vmem [thread:$0]  %s218, 512, %s220, [#allocation3], 128, 128, 8
        $region16: #{_lambda_.1} parent=11 // pred_fallthru
          _
        // Predicated region
        $region17: #{_lambda_.1} parent=11 // pred_check
          %p226 = pneg %p87
        $region18: #{_lambda_.1} parent=11 // pred_check_branch
          %228 = sbr.rel (%p226) target = $region20
        $region19: #{_lambda_.1} parent=11 // pred_region
          _
        $region20: #{_lambda_.1} parent=11 // pred_fallthru
          _
        // Predicated region
        $region21: #{_lambda_.1} parent=11 // pred_check
          %p229 = pneg %p108
        $region22: #{_lambda_.1} parent=11 // pred_check_branch
          %231 = sbr.rel (%p229) target = $region24
        $region23: #{_lambda_.1} parent=11 // pred_region
          %233 = vsyncadd [#allocation6], 0
          %s234 = sshll.u32 %s3, 4
          %s235 = int_to_ptr.hbm [resolvable:$true] %s234
          %s236 = sshll.u32 [#allocation5], 4
          %s237 = int_to_ptr.vmem [resolvable:$true] %s236
          %242 = dma.hbm_to_vmem [thread:$0]  %s235, 256, %s237, [#allocation6], 128, 128, 8
        $region24: #{_lambda_.1} parent=11 // pred_fallthru
          _
        // Predicated region
        $region25: #{_lambda_.1} parent=11 // pred_check
          %p243 = pneg %p129
        $region26: #{_lambda_.1} parent=11 // pred_check_branch
          %245 = sbr.rel (%p243) target = $region28
        $region27: #{_lambda_.1} parent=11 // pred_region
          %247 = vsyncadd [#allocation6], 0
          %s248 = sshll.u32 %s4, 4
          %s249 = int_to_ptr.hbm [resolvable:$true] %s248
          %s250 = sshll.u32 [#allocation7], 4
          %s251 = int_to_ptr.vmem [resolvable:$true] %s250
          %256 = dma.hbm_to_vmem [thread:$0]  %s249, 256, %s251, [#allocation6], 128, 128, 8
        $region28: #{_lambda_.1} parent=11 // pred_fallthru
          _
        // Predicated region
        $region29: #{_lambda_.1} parent=11 // pred_check
          %p257 = pneg %p150
        $region30: #{_lambda_.1} parent=11 // pred_check_branch
          %259 = sbr.rel (%p257) target = $region32
        $region31: #{_lambda_.1} parent=11 // pred_region
          %261 = vsyncadd [#allocation9], 0
          %s263 = sshll.u32 %s5, 4
          %s264 = int_to_ptr.hbm [resolvable:$true] %s263
          %s265 = sshll.u32 [#allocation8], 4
          %s266 = int_to_ptr.vmem [resolvable:$true] %s265
          %268 = dma.hbm_to_vmem [thread:$0]  %s264, 128, %s266, [#allocation9]
        $region32: #{_lambda_.1} parent=11 // pred_fallthru
          _
        // Predicated region
        $region33: #{_lambda_.1} parent=11 // pred_check
          %p269 = pneg %p171
        $region34: #{_lambda_.1} parent=11 // pred_check_branch
          %271 = sbr.rel (%p269) target = $region36
        $region35: #{_lambda_.1} parent=11 // pred_region
          _
        $region36: #{_lambda_.1} parent=11 // pred_fallthru
          _
      $region12: #{_lambda_.1} parent=5 // pred_fallthru
        _
      %p272 = scmp.lt.s32.totalorder %s19, 2
      // Predicated region
      $region37: #{_lambda_.1} parent=5 // pred_check
        %p273 = pneg %p272
      $region38: #{_lambda_.1} parent=5 // pred_check_branch
        %275 = sbr.rel (%p273) target = $region40
      $region39: #{_lambda_.1} parent=5 // pred_region
        // Predicated region
        $region41: #{_lambda_.1} parent=39 // pred_check
          %p276 = pneg %p39
        $region42: #{_lambda_.1} parent=39 // pred_check_branch
          %278 = sbr.rel (%p276) target = $region44
        $region43: #{_lambda_.1} parent=39 // pred_region
          %p279 = scmp.lt.s32.totalorder %s19, 1
          %s280 = scalar_select %p279, %s19, 1
          %s281 = smul.addr %s280, 2
          %s282 = scalar_lea.vmem %s0, %s281
        $region44: #{_lambda_.1} parent=39 // pred_fallthru
          _
      $region40: #{_lambda_.1} parent=5 // pred_fallthru
        _
      %p283 = scmp.le.s32.totalorder 1, %s19
      %p284 = scmp.lt.s32.totalorder %s19, 3
      %p285 = pnand %p283, %p284
      %p286 = pneg %p285
      // Predicated region
      $region45: #{_lambda_.1} parent=5 // pred_check
        _
      $region46: #{_lambda_.1} parent=5 // pred_check_branch
        %288 = sbr.rel (%p285) target = $region48
      $region47: #{_lambda_.1} parent=5 // pred_region
        %s289 = ssub.s32 %s19, 1
        // Predicated region
        $region49: #{_lambda_.1} parent=47 // pred_check
          %p290 = pneg %p66
        $region50: #{_lambda_.1} parent=47 // pred_check_branch
          %292 = sbr.rel (%p290) target = $region52
        $region51: #{_lambda_.1} parent=47 // pred_region
          %294 = dma.done [#allocation3], 512
        $region52: #{_lambda_.1} parent=47 // pred_fallthru
          _
        // Predicated region
        $region53: #{_lambda_.1} parent=47 // pred_check
          %p295 = pneg %p108
        $region54: #{_lambda_.1} parent=47 // pred_check_branch
          %297 = sbr.rel (%p295) target = $region56
        $region55: #{_lambda_.1} parent=47 // pred_region
          %299 = dma.done [#allocation6], 256
        $region56: #{_lambda_.1} parent=47 // pred_fallthru
          _
        // Predicated region
        $region57: #{_lambda_.1} parent=47 // pred_check
          %p300 = pneg %p129
        $region58: #{_lambda_.1} parent=47 // pred_check_branch
          %302 = sbr.rel (%p300) target = $region60
        $region59: #{_lambda_.1} parent=47 // pred_region
          %304 = dma.done [#allocation6], 256
        $region60: #{_lambda_.1} parent=47 // pred_fallthru
          _
        // Predicated region
        $region61: #{_lambda_.1} parent=47 // pred_check
          %p305 = pneg %p150
        $region62: #{_lambda_.1} parent=47 // pred_check_branch
          %307 = sbr.rel (%p305) target = $region64
        $region63: #{_lambda_.1} parent=47 // pred_region
          %309 = dma.done [#allocation9], 128
        $region64: #{_lambda_.1} parent=47 // pred_fallthru
          _
        %p310 = scmp.lt.s32.totalorder %s24, 1
        %s311 = scalar_select %p310, %s24, 1
        %s312 = smul.addr %s311, 2
        %s313 = scalar_lea.vmem %s0, %s312
        %p314 = pneg %p45
        %p315 = pneg %p42
        %p316 = pneg %p66
        %p317 = pneg %p63
        %p318 = pneg %p87
        %p319 = pneg %p84
        %p320 = pneg %p108
        %p321 = pneg %p105
        %p322 = pneg %p129
        %p323 = pneg %p126
        %p324 = pneg %p150
        %p325 = pneg %p147
        %p326 = pneg %p171
        %p327 = pneg %p168
        %p328 = pneg %p197
        %p329 = pneg %p194
        %s330 = sand.u32 %s184, 1
        %s331 = scalar_lea.sflag [#allocation4], %s330
        %s332 = sand.u32 %s184, 1
        %s333 = smul.addr %s332, 512
        %s334 = scalar_lea.vmem [#allocation10], %s333
        %p335 = scmp.lt.s32.totalorder %s24, 1
        %s336 = scalar_select %p335, %s24, 1
        %s337 = smul.addr %s336, 2
        %s338 = scalar_lea.vmem %s0, %s337
        %v339 = vlaneseq
        %v340 = vshrl.u32 %v339, 7
        %v341 = vadd.s32 %v340, 8
        %v342 = vadd.s32 %v340, 16
        %v343 = vadd.s32 %v340, 24
        %v344 = vadd.s32 %v340, 32
        %v345 = vadd.s32 %v340, 40
        %v346 = vadd.s32 %v340, 48
        %v347 = vadd.s32 %v340, 56
        %v348 = vadd.s32 %v340, 64
        %v349 = vadd.s32 %v340, 72
        %v350 = vadd.s32 %v340, 80
        %v351 = vadd.s32 %v340, 88
        %v352 = vadd.s32 %v340, 96
        %v353 = vadd.s32 %v340, 104
        %v354 = vadd.s32 %v340, 112
        %v355 = vadd.s32 %v340, 120
        %v356 = vadd.s32 %v340, 128
        %v357 = vadd.s32 %v340, 136
        %v358 = vadd.s32 %v340, 144
        %v359 = vadd.s32 %v340, 152
        %v360 = vadd.s32 %v340, 160
        %v361 = vadd.s32 %v340, 168
        %v362 = vadd.s32 %v340, 176
        %v363 = vadd.s32 %v340, 184
        %v364 = vadd.s32 %v340, 192
        %v365 = vadd.s32 %v340, 200
        %v366 = vadd.s32 %v340, 208
        %v367 = vadd.s32 %v340, 216
        %v368 = vadd.s32 %v340, 224
        %v369 = vadd.s32 %v340, 232
        %v370 = vadd.s32 %v340, 240
        %v371 = vadd.s32 %v340, 248
        %v372 = vlaneseq
        %v373 = vand.u32 %v372, 127
        %v374 = vadd.s32 %v373, 128
        %vm375 = vcmp.lt.s32.totalorder %v373, 0
        %v376 = vsub.s32 0, %v373
        %v377 = vsel %vm375, %v376, %v373
        %v378 = vshrl.u32 %v377, 4
        %v379 = vand.u32 %v377, 15
        %v380 = vsub.s32 0, %v379
        %v381 = vsel %vm375, %v380, %v379
        %vm382 = vcmp.lt.s32.totalorder %v374, 0
        %v383 = vsub.s32 0, %v374
        %v384 = vsel %vm382, %v383, %v374
        %v385 = vshrl.u32 %v384, 4
        %v386 = vand.u32 %v384, 15
        %v387 = vsub.s32 0, %v386
        %v388 = vsel %vm382, %v387, %v386
        %vm389 = vcmp.ne.s32.totalorder %v381, 0
        %vm390 = vcmp.ne.s32.totalorder %v388, 0
        %vm391 = vcmp.lt.s32.totalorder %v381, 0
        %vm392 = vcmp.lt.s32.totalorder %v388, 0
        %vm393 = vmand %vm391, %vm389
        %vm394 = vmand %vm392, %vm390
        %v395 = vadd.s32 %v381, 16
        %v396 = vadd.s32 %v388, 16
        %v397 = vsel %vm393, %v395, %v381
        %v398 = vsel %vm394, %v396, %v388
        %vm399 = vcmp.ne.s32.totalorder %v397, 15
        %vm400 = vcmp.ne.s32.totalorder %v398, 15
        %v401 = vadd.s32 %v373, 1
        %v402 = vadd.s32 %v374, 1
        %vm403 = vcmp.eq.s32.totalorder %v340, %v401
        %vm404 = vcmp.eq.s32.totalorder %v340, %v402
        %vm405 = vcmp.eq.s32.totalorder %v341, %v401
        %vm406 = vcmp.eq.s32.totalorder %v341, %v402
        %vm407 = vcmp.eq.s32.totalorder %v342, %v401
        %vm408 = vcmp.eq.s32.totalorder %v342, %v402
        %vm409 = vcmp.eq.s32.totalorder %v343, %v401
        %vm410 = vcmp.eq.s32.totalorder %v343, %v402
        %vm411 = vcmp.eq.s32.totalorder %v344, %v401
        %vm412 = vcmp.eq.s32.totalorder %v344, %v402
        %vm413 = vcmp.eq.s32.totalorder %v345, %v401
        %vm414 = vcmp.eq.s32.totalorder %v345, %v402
        %vm415 = vcmp.eq.s32.totalorder %v346, %v401
        %vm416 = vcmp.eq.s32.totalorder %v346, %v402
        %vm417 = vcmp.eq.s32.totalorder %v347, %v401
        %vm418 = vcmp.eq.s32.totalorder %v347, %v402
        %vm419 = vcmp.eq.s32.totalorder %v348, %v401
        %vm420 = vcmp.eq.s32.totalorder %v348, %v402
        %vm421 = vcmp.eq.s32.totalorder %v349, %v401
        %vm422 = vcmp.eq.s32.totalorder %v349, %v402
        %vm423 = vcmp.eq.s32.totalorder %v350, %v401
        %vm424 = vcmp.eq.s32.totalorder %v350, %v402
        %vm425 = vcmp.eq.s32.totalorder %v351, %v401
        %vm426 = vcmp.eq.s32.totalorder %v351, %v402
        %vm427 = vcmp.eq.s32.totalorder %v352, %v401
        %vm428 = vcmp.eq.s32.totalorder %v352, %v402
        %vm429 = vcmp.eq.s32.totalorder %v353, %v401
        %vm430 = vcmp.eq.s32.totalorder %v353, %v402
        %vm431 = vcmp.eq.s32.totalorder %v354, %v401
        %vm432 = vcmp.eq.s32.totalorder %v354, %v402
        %vm433 = vcmp.eq.s32.totalorder %v355, %v401
        %vm434 = vcmp.eq.s32.totalorder %v355, %v402
        %vm435 = vcmp.eq.s32.totalorder %v356, %v401
        %vm436 = vcmp.eq.s32.totalorder %v356, %v402
        %vm437 = vcmp.eq.s32.totalorder %v357, %v401
        %vm438 = vcmp.eq.s32.totalorder %v357, %v402
        %vm439 = vcmp.eq.s32.totalorder %v358, %v401
        %vm440 = vcmp.eq.s32.totalorder %v358, %v402
        %vm441 = vcmp.eq.s32.totalorder %v359, %v401
        %vm442 = vcmp.eq.s32.totalorder %v359, %v402
        %vm443 = vcmp.eq.s32.totalorder %v360, %v401
        %vm444 = vcmp.eq.s32.totalorder %v360, %v402
        %vm445 = vcmp.eq.s32.totalorder %v361, %v401
        %vm446 = vcmp.eq.s32.totalorder %v361, %v402
        %vm447 = vcmp.eq.s32.totalorder %v362, %v401
        %vm448 = vcmp.eq.s32.totalorder %v362, %v402
        %vm449 = vcmp.eq.s32.totalorder %v363, %v401
        %vm450 = vcmp.eq.s32.totalorder %v363, %v402
        %vm451 = vcmp.eq.s32.totalorder %v364, %v401
        %vm452 = vcmp.eq.s32.totalorder %v364, %v402
        %vm453 = vcmp.eq.s32.totalorder %v365, %v401
        %vm454 = vcmp.eq.s32.totalorder %v365, %v402
        %vm455 = vcmp.eq.s32.totalorder %v366, %v401
        %vm456 = vcmp.eq.s32.totalorder %v366, %v402
        %vm457 = vcmp.eq.s32.totalorder %v367, %v401
        %vm458 = vcmp.eq.s32.totalorder %v367, %v402
        %vm459 = vcmp.eq.s32.totalorder %v368, %v401
        %vm460 = vcmp.eq.s32.totalorder %v368, %v402
        %vm461 = vcmp.eq.s32.totalorder %v369, %v401
        %vm462 = vcmp.eq.s32.totalorder %v369, %v402
        %vm463 = vcmp.eq.s32.totalorder %v370, %v401
        %vm464 = vcmp.eq.s32.totalorder %v370, %v402
        %vm465 = vcmp.eq.s32.totalorder %v371, %v401
        %vm466 = vcmp.eq.s32.totalorder %v371, %v402
        %vm467 = vmand %vm403, %vm399
        %vm468 = vmand %vm404, %vm400
        %vm469 = vmand %vm405, %vm399
        %vm470 = vmand %vm406, %vm400
        %vm471 = vmand %vm407, %vm399
        %vm472 = vmand %vm408, %vm400
        %vm473 = vmand %vm409, %vm399
        %vm474 = vmand %vm410, %vm400
        %vm475 = vmand %vm411, %vm399
        %vm476 = vmand %vm412, %vm400
        %vm477 = vmand %vm413, %vm399
        %vm478 = vmand %vm414, %vm400
        %vm479 = vmand %vm415, %vm399
        %vm480 = vmand %vm416, %vm400
        %vm481 = vmand %vm417, %vm399
        %vm482 = vmand %vm418, %vm400
        %vm483 = vmand %vm419, %vm399
        %vm484 = vmand %vm420, %vm400
        %vm485 = vmand %vm421, %vm399
        %vm486 = vmand %vm422, %vm400
        %vm487 = vmand %vm423, %vm399
        %vm488 = vmand %vm424, %vm400
        %vm489 = vmand %vm425, %vm399
        %vm490 = vmand %vm426, %vm400
        %vm491 = vmand %vm427, %vm399
        %vm492 = vmand %vm428, %vm400
        %vm493 = vmand %vm429, %vm399
        %vm494 = vmand %vm430, %vm400
        %vm495 = vmand %vm431, %vm399
        %vm496 = vmand %vm432, %vm400
        %vm497 = vmand %vm433, %vm399
        %vm498 = vmand %vm434, %vm400
        %vm499 = vmand %vm435, %vm399
        %vm500 = vmand %vm436, %vm400
        %vm501 = vmand %vm437, %vm399
        %vm502 = vmand %vm438, %vm400
        %vm503 = vmand %vm439, %vm399
        %vm504 = vmand %vm440, %vm400
        %vm505 = vmand %vm441, %vm399
        %vm506 = vmand %vm442, %vm400
        %vm507 = vmand %vm443, %vm399
        %vm508 = vmand %vm444, %vm400
        %vm509 = vmand %vm445, %vm399
        %vm510 = vmand %vm446, %vm400
        %vm511 = vmand %vm447, %vm399
        %vm512 = vmand %vm448, %vm400
        %vm513 = vmand %vm449, %vm399
        %vm514 = vmand %vm450, %vm400
        %vm515 = vmand %vm451, %vm399
        %vm516 = vmand %vm452, %vm400
        %vm517 = vmand %vm453, %vm399
        %vm518 = vmand %vm454, %vm400
        %vm519 = vmand %vm455, %vm399
        %vm520 = vmand %vm456, %vm400
        %vm521 = vmand %vm457, %vm399
        %vm522 = vmand %vm458, %vm400
        %vm523 = vmand %vm459, %vm399
        %vm524 = vmand %vm460, %vm400
        %vm525 = vmand %vm461, %vm399
        %vm526 = vmand %vm462, %vm400
        %vm527 = vmand %vm463, %vm399
        %vm528 = vmand %vm464, %vm400
        %vm529 = vmand %vm465, %vm399
        %vm530 = vmand %vm466, %vm400
        %v531 = vsel %vm467, 1, 0
        %v532 = vsel %vm468, 1, 0
        %v533 = vsel %vm469, 1, 0
        %v534 = vsel %vm470, 1, 0
        %v535 = vsel %vm471, 1, 0
        %v536 = vsel %vm472, 1, 0
        %v537 = vsel %vm473, 1, 0
        %v538 = vsel %vm474, 1, 0
        %v539 = vsel %vm475, 1, 0
        %v540 = vsel %vm476, 1, 0
        %v541 = vsel %vm477, 1, 0
        %v542 = vsel %vm478, 1, 0
        %v543 = vsel %vm479, 1, 0
        %v544 = vsel %vm480, 1, 0
        %v545 = vsel %vm481, 1, 0
        %v546 = vsel %vm482, 1, 0
        %v547 = vsel %vm483, 1, 0
        %v548 = vsel %vm484, 1, 0
        %v549 = vsel %vm485, 1, 0
        %v550 = vsel %vm486, 1, 0
        %v551 = vsel %vm487, 1, 0
        %v552 = vsel %vm488, 1, 0
        %v553 = vsel %vm489, 1, 0
        %v554 = vsel %vm490, 1, 0
        %v555 = vsel %vm491, 1, 0
        %v556 = vsel %vm492, 1, 0
        %v557 = vsel %vm493, 1, 0
        %v558 = vsel %vm494, 1, 0
        %v559 = vsel %vm495, 1, 0
        %v560 = vsel %vm496, 1, 0
        %v561 = vsel %vm497, 1, 0
        %v562 = vsel %vm498, 1, 0
        %v563 = vsel %vm499, 1, 0
        %v564 = vsel %vm500, 1, 0
        %v565 = vsel %vm501, 1, 0
        %v566 = vsel %vm502, 1, 0
        %v567 = vsel %vm503, 1, 0
        %v568 = vsel %vm504, 1, 0
        %v569 = vsel %vm505, 1, 0
        %v570 = vsel %vm506, 1, 0
        %v571 = vsel %vm507, 1, 0
        %v572 = vsel %vm508, 1, 0
        %v573 = vsel %vm509, 1, 0
        %v574 = vsel %vm510, 1, 0
        %v575 = vsel %vm511, 1, 0
        %v576 = vsel %vm512, 1, 0
        %v577 = vsel %vm513, 1, 0
        %v578 = vsel %vm514, 1, 0
        %v579 = vsel %vm515, 1, 0
        %v580 = vsel %vm516, 1, 0
        %v581 = vsel %vm517, 1, 0
        %v582 = vsel %vm518, 1, 0
        %v583 = vsel %vm519, 1, 0
        %v584 = vsel %vm520, 1, 0
        %v585 = vsel %vm521, 1, 0
        %v586 = vsel %vm522, 1, 0
        %v587 = vsel %vm523, 1, 0
        %v588 = vsel %vm524, 1, 0
        %v589 = vsel %vm525, 1, 0
        %v590 = vsel %vm526, 1, 0
        %v591 = vsel %vm527, 1, 0
        %v592 = vsel %vm528, 1, 0
        %v593 = vsel %vm529, 1, 0
        %v594 = vsel %vm530, 1, 0
        %v595 = vcvt.s32.f32 %v531
        %v596 = vcvt.s32.f32 %v532
        %v597 = vcvt.s32.f32 %v533
        %v598 = vcvt.s32.f32 %v534
        %v599 = vcvt.s32.f32 %v535
        %v600 = vcvt.s32.f32 %v536
        %v601 = vcvt.s32.f32 %v537
        %v602 = vcvt.s32.f32 %v538
        %v603 = vcvt.s32.f32 %v539
        %v604 = vcvt.s32.f32 %v540
        %v605 = vcvt.s32.f32 %v541
        %v606 = vcvt.s32.f32 %v542
        %v607 = vcvt.s32.f32 %v543
        %v608 = vcvt.s32.f32 %v544
        %v609 = vcvt.s32.f32 %v545
        %v610 = vcvt.s32.f32 %v546
        %v611 = vcvt.s32.f32 %v547
        %v612 = vcvt.s32.f32 %v548
        %v613 = vcvt.s32.f32 %v549
        %v614 = vcvt.s32.f32 %v550
        %v615 = vcvt.s32.f32 %v551
        %v616 = vcvt.s32.f32 %v552
        %v617 = vcvt.s32.f32 %v553
        %v618 = vcvt.s32.f32 %v554
        %v619 = vcvt.s32.f32 %v555
        %v620 = vcvt.s32.f32 %v556
        %v621 = vcvt.s32.f32 %v557
        %v622 = vcvt.s32.f32 %v558
        %v623 = vcvt.s32.f32 %v559
        %v624 = vcvt.s32.f32 %v560
        %v625 = vcvt.s32.f32 %v561
        %v626 = vcvt.s32.f32 %v562
        %v627 = vcvt.s32.f32 %v563
        %v628 = vcvt.s32.f32 %v564
        %v629 = vcvt.s32.f32 %v565
        %v630 = vcvt.s32.f32 %v566
        %v631 = vcvt.s32.f32 %v567
        %v632 = vcvt.s32.f32 %v568
        %v633 = vcvt.s32.f32 %v569
        %v634 = vcvt.s32.f32 %v570
        %v635 = vcvt.s32.f32 %v571
        %v636 = vcvt.s32.f32 %v572
        %v637 = vcvt.s32.f32 %v573
        %v638 = vcvt.s32.f32 %v574
        %v639 = vcvt.s32.f32 %v575
        %v640 = vcvt.s32.f32 %v576
        %v641 = vcvt.s32.f32 %v577
        %v642 = vcvt.s32.f32 %v578
        %v643 = vcvt.s32.f32 %v579
        %v644 = vcvt.s32.f32 %v580
        %v645 = vcvt.s32.f32 %v581
        %v646 = vcvt.s32.f32 %v582
        %v647 = vcvt.s32.f32 %v583
        %v648 = vcvt.s32.f32 %v584
        %v649 = vcvt.s32.f32 %v585
        %v650 = vcvt.s32.f32 %v586
        %v651 = vcvt.s32.f32 %v587
        %v652 = vcvt.s32.f32 %v588
        %v653 = vcvt.s32.f32 %v589
        %v654 = vcvt.s32.f32 %v590
        %v655 = vcvt.s32.f32 %v591
        %v656 = vcvt.s32.f32 %v592
        %v657 = vcvt.s32.f32 %v593
        %v658 = vcvt.s32.f32 %v594
        %v659 = vadd.s32 %v373, 16
        %v660 = vadd.s32 %v374, 16
        %vm661 = vcmp.eq.s32.totalorder %v340, %v659
        %vm662 = vcmp.eq.s32.totalorder %v340, %v660
        %vm663 = vcmp.eq.s32.totalorder %v341, %v659
        %vm664 = vcmp.eq.s32.totalorder %v341, %v660
        %vm665 = vcmp.eq.s32.totalorder %v342, %v659
        %vm666 = vcmp.eq.s32.totalorder %v342, %v660
        %vm667 = vcmp.eq.s32.totalorder %v343, %v659
        %vm668 = vcmp.eq.s32.totalorder %v343, %v660
        %vm669 = vcmp.eq.s32.totalorder %v344, %v659
        %vm670 = vcmp.eq.s32.totalorder %v344, %v660
        %vm671 = vcmp.eq.s32.totalorder %v345, %v659
        %vm672 = vcmp.eq.s32.totalorder %v345, %v660
        %vm673 = vcmp.eq.s32.totalorder %v346, %v659
        %vm674 = vcmp.eq.s32.totalorder %v346, %v660
        %vm675 = vcmp.eq.s32.totalorder %v347, %v659
        %vm676 = vcmp.eq.s32.totalorder %v347, %v660
        %vm677 = vcmp.eq.s32.totalorder %v348, %v659
        %vm678 = vcmp.eq.s32.totalorder %v348, %v660
        %vm679 = vcmp.eq.s32.totalorder %v349, %v659
        %vm680 = vcmp.eq.s32.totalorder %v349, %v660
        %vm681 = vcmp.eq.s32.totalorder %v350, %v659
        %vm682 = vcmp.eq.s32.totalorder %v350, %v660
        %vm683 = vcmp.eq.s32.totalorder %v351, %v659
        %vm684 = vcmp.eq.s32.totalorder %v351, %v660
        %vm685 = vcmp.eq.s32.totalorder %v352, %v659
        %vm686 = vcmp.eq.s32.totalorder %v352, %v660
        %vm687 = vcmp.eq.s32.totalorder %v353, %v659
        %vm688 = vcmp.eq.s32.totalorder %v353, %v660
        %vm689 = vcmp.eq.s32.totalorder %v354, %v659
        %vm690 = vcmp.eq.s32.totalorder %v354, %v660
        %vm691 = vcmp.eq.s32.totalorder %v355, %v659
        %vm692 = vcmp.eq.s32.totalorder %v355, %v660
        %vm693 = vcmp.eq.s32.totalorder %v356, %v659
        %vm694 = vcmp.eq.s32.totalorder %v356, %v660
        %vm695 = vcmp.eq.s32.totalorder %v357, %v659
        %vm696 = vcmp.eq.s32.totalorder %v357, %v660
        %vm697 = vcmp.eq.s32.totalorder %v358, %v659
        %vm698 = vcmp.eq.s32.totalorder %v358, %v660
        %vm699 = vcmp.eq.s32.totalorder %v359, %v659
        %vm700 = vcmp.eq.s32.totalorder %v359, %v660
        %vm701 = vcmp.eq.s32.totalorder %v360, %v659
        %vm702 = vcmp.eq.s32.totalorder %v360, %v660
        %vm703 = vcmp.eq.s32.totalorder %v361, %v659
        %vm704 = vcmp.eq.s32.totalorder %v361, %v660
        %vm705 = vcmp.eq.s32.totalorder %v362, %v659
        %vm706 = vcmp.eq.s32.totalorder %v362, %v660
        %vm707 = vcmp.eq.s32.totalorder %v363, %v659
        %vm708 = vcmp.eq.s32.totalorder %v363, %v660
        %vm709 = vcmp.eq.s32.totalorder %v364, %v659
        %vm710 = vcmp.eq.s32.totalorder %v364, %v660
        %vm711 = vcmp.eq.s32.totalorder %v365, %v659
        %vm712 = vcmp.eq.s32.totalorder %v365, %v660
        %vm713 = vcmp.eq.s32.totalorder %v366, %v659
        %vm714 = vcmp.eq.s32.totalorder %v366, %v660
        %vm715 = vcmp.eq.s32.totalorder %v367, %v659
        %vm716 = vcmp.eq.s32.totalorder %v367, %v660
        %vm717 = vcmp.eq.s32.totalorder %v368, %v659
        %vm718 = vcmp.eq.s32.totalorder %v368, %v660
        %vm719 = vcmp.eq.s32.totalorder %v369, %v659
        %vm720 = vcmp.eq.s32.totalorder %v369, %v660
        %vm721 = vcmp.eq.s32.totalorder %v370, %v659
        %vm722 = vcmp.eq.s32.totalorder %v370, %v660
        %vm723 = vcmp.eq.s32.totalorder %v371, %v659
        %vm724 = vcmp.eq.s32.totalorder %v371, %v660
        %v725 = vsel %vm661, 1, 0
        %v726 = vsel %vm662, 1, 0
        %v727 = vsel %vm663, 1, 0
        %v728 = vsel %vm664, 1, 0
        %v729 = vsel %vm665, 1, 0
        %v730 = vsel %vm666, 1, 0
        %v731 = vsel %vm667, 1, 0
        %v732 = vsel %vm668, 1, 0
        %v733 = vsel %vm669, 1, 0
        %v734 = vsel %vm670, 1, 0
        %v735 = vsel %vm671, 1, 0
        %v736 = vsel %vm672, 1, 0
        %v737 = vsel %vm673, 1, 0
        %v738 = vsel %vm674, 1, 0
        %v739 = vsel %vm675, 1, 0
        %v740 = vsel %vm676, 1, 0
        %v741 = vsel %vm677, 1, 0
        %v742 = vsel %vm678, 1, 0
        %v743 = vsel %vm679, 1, 0
        %v744 = vsel %vm680, 1, 0
        %v745 = vsel %vm681, 1, 0
        %v746 = vsel %vm682, 1, 0
        %v747 = vsel %vm683, 1, 0
        %v748 = vsel %vm684, 1, 0
        %v749 = vsel %vm685, 1, 0
        %v750 = vsel %vm686, 1, 0
        %v751 = vsel %vm687, 1, 0
        %v752 = vsel %vm688, 1, 0
        %v753 = vsel %vm689, 1, 0
        %v754 = vsel %vm690, 1, 0
        %v755 = vsel %vm691, 1, 0
        %v756 = vsel %vm692, 1, 0
        %v757 = vsel %vm693, 1, 0
        %v758 = vsel %vm694, 1, 0
        %v759 = vsel %vm695, 1, 0
        %v760 = vsel %vm696, 1, 0
        %v761 = vsel %vm697, 1, 0
        %v762 = vsel %vm698, 1, 0
        %v763 = vsel %vm699, 1, 0
        %v764 = vsel %vm700, 1, 0
        %v765 = vsel %vm701, 1, 0
        %v766 = vsel %vm702, 1, 0
        %v767 = vsel %vm703, 1, 0
        %v768 = vsel %vm704, 1, 0
        %v769 = vsel %vm705, 1, 0
        %v770 = vsel %vm706, 1, 0
        %v771 = vsel %vm707, 1, 0
        %v772 = vsel %vm708, 1, 0
        %v773 = vsel %vm709, 1, 0
        %v774 = vsel %vm710, 1, 0
        %v775 = vsel %vm711, 1, 0
        %v776 = vsel %vm712, 1, 0
        %v777 = vsel %vm713, 1, 0
        %v778 = vsel %vm714, 1, 0
        %v779 = vsel %vm715, 1, 0
        %v780 = vsel %vm716, 1, 0
        %v781 = vsel %vm717, 1, 0
        %v782 = vsel %vm718, 1, 0
        %v783 = vsel %vm719, 1, 0
        %v784 = vsel %vm720, 1, 0
        %v785 = vsel %vm721, 1, 0
        %v786 = vsel %vm722, 1, 0
        %v787 = vsel %vm723, 1, 0
        %v788 = vsel %vm724, 1, 0
        %v789 = vcvt.s32.f32 %v725
        %v790 = vcvt.s32.f32 %v726
        %v791 = vcvt.s32.f32 %v727
        %v792 = vcvt.s32.f32 %v728
        %v793 = vcvt.s32.f32 %v729
        %v794 = vcvt.s32.f32 %v730
        %v795 = vcvt.s32.f32 %v731
        %v796 = vcvt.s32.f32 %v732
        %v797 = vcvt.s32.f32 %v733
        %v798 = vcvt.s32.f32 %v734
        %v799 = vcvt.s32.f32 %v735
        %v800 = vcvt.s32.f32 %v736
        %v801 = vcvt.s32.f32 %v737
        %v802 = vcvt.s32.f32 %v738
        %v803 = vcvt.s32.f32 %v739
        %v804 = vcvt.s32.f32 %v740
        %v805 = vcvt.s32.f32 %v741
        %v806 = vcvt.s32.f32 %v742
        %v807 = vcvt.s32.f32 %v743
        %v808 = vcvt.s32.f32 %v744
        %v809 = vcvt.s32.f32 %v745
        %v810 = vcvt.s32.f32 %v746
        %v811 = vcvt.s32.f32 %v747
        %v812 = vcvt.s32.f32 %v748
        %v813 = vcvt.s32.f32 %v749
        %v814 = vcvt.s32.f32 %v750
        %v815 = vcvt.s32.f32 %v751
        %v816 = vcvt.s32.f32 %v752
        %v817 = vcvt.s32.f32 %v753
        %v818 = vcvt.s32.f32 %v754
        %v819 = vcvt.s32.f32 %v755
        %v820 = vcvt.s32.f32 %v756
        %v821 = vcvt.s32.f32 %v757
        %v822 = vcvt.s32.f32 %v758
        %v823 = vcvt.s32.f32 %v759
        %v824 = vcvt.s32.f32 %v760
        %v825 = vcvt.s32.f32 %v761
        %v826 = vcvt.s32.f32 %v762
        %v827 = vcvt.s32.f32 %v763
        %v828 = vcvt.s32.f32 %v764
        %v829 = vcvt.s32.f32 %v765
        %v830 = vcvt.s32.f32 %v766
        %v831 = vcvt.s32.f32 %v767
        %v832 = vcvt.s32.f32 %v768
        %v833 = vcvt.s32.f32 %v769
        %v834 = vcvt.s32.f32 %v770
        %v835 = vcvt.s32.f32 %v771
        %v836 = vcvt.s32.f32 %v772
        %v837 = vcvt.s32.f32 %v773
        %v838 = vcvt.s32.f32 %v774
        %v839 = vcvt.s32.f32 %v775
        %v840 = vcvt.s32.f32 %v776
        %v841 = vcvt.s32.f32 %v777
        %v842 = vcvt.s32.f32 %v778
        %v843 = vcvt.s32.f32 %v779
        %v844 = vcvt.s32.f32 %v780
        %v845 = vcvt.s32.f32 %v781
        %v846 = vcvt.s32.f32 %v782
        %v847 = vcvt.s32.f32 %v783
        %v848 = vcvt.s32.f32 %v784
        %v849 = vcvt.s32.f32 %v785
        %v850 = vcvt.s32.f32 %v786
        %v851 = vcvt.s32.f32 %v787
        %v852 = vcvt.s32.f32 %v788
        %v853 = vadd.s32 %v373, 17
        %v854 = vadd.s32 %v374, 17
        %vm855 = vcmp.eq.s32.totalorder %v340, %v853
        %vm856 = vcmp.eq.s32.totalorder %v340, %v854
        %vm857 = vcmp.eq.s32.totalorder %v341, %v853
        %vm858 = vcmp.eq.s32.totalorder %v341, %v854
        %vm859 = vcmp.eq.s32.totalorder %v342, %v853
        %vm860 = vcmp.eq.s32.totalorder %v342, %v854
        %vm861 = vcmp.eq.s32.totalorder %v343, %v853
        %vm862 = vcmp.eq.s32.totalorder %v343, %v854
        %vm863 = vcmp.eq.s32.totalorder %v344, %v853
        %vm864 = vcmp.eq.s32.totalorder %v344, %v854
        %vm865 = vcmp.eq.s32.totalorder %v345, %v853
        %vm866 = vcmp.eq.s32.totalorder %v345, %v854
        %vm867 = vcmp.eq.s32.totalorder %v346, %v853
        %vm868 = vcmp.eq.s32.totalorder %v346, %v854
        %vm869 = vcmp.eq.s32.totalorder %v347, %v853
        %vm870 = vcmp.eq.s32.totalorder %v347, %v854
        %vm871 = vcmp.eq.s32.totalorder %v348, %v853
        %vm872 = vcmp.eq.s32.totalorder %v348, %v854
        %vm873 = vcmp.eq.s32.totalorder %v349, %v853
        %vm874 = vcmp.eq.s32.totalorder %v349, %v854
        %vm875 = vcmp.eq.s32.totalorder %v350, %v853
        %vm876 = vcmp.eq.s32.totalorder %v350, %v854
        %vm877 = vcmp.eq.s32.totalorder %v351, %v853
        %vm878 = vcmp.eq.s32.totalorder %v351, %v854
        %vm879 = vcmp.eq.s32.totalorder %v352, %v853
        %vm880 = vcmp.eq.s32.totalorder %v352, %v854
        %vm881 = vcmp.eq.s32.totalorder %v353, %v853
        %vm882 = vcmp.eq.s32.totalorder %v353, %v854
        %vm883 = vcmp.eq.s32.totalorder %v354, %v853
        %vm884 = vcmp.eq.s32.totalorder %v354, %v854
        %vm885 = vcmp.eq.s32.totalorder %v355, %v853
        %vm886 = vcmp.eq.s32.totalorder %v355, %v854
        %vm887 = vcmp.eq.s32.totalorder %v356, %v853
        %vm888 = vcmp.eq.s32.totalorder %v356, %v854
        %vm889 = vcmp.eq.s32.totalorder %v357, %v853
        %vm890 = vcmp.eq.s32.totalorder %v357, %v854
        %vm891 = vcmp.eq.s32.totalorder %v358, %v853
        %vm892 = vcmp.eq.s32.totalorder %v358, %v854
        %vm893 = vcmp.eq.s32.totalorder %v359, %v853
        %vm894 = vcmp.eq.s32.totalorder %v359, %v854
        %vm895 = vcmp.eq.s32.totalorder %v360, %v853
        %vm896 = vcmp.eq.s32.totalorder %v360, %v854
        %vm897 = vcmp.eq.s32.totalorder %v361, %v853
        %vm898 = vcmp.eq.s32.totalorder %v361, %v854
        %vm899 = vcmp.eq.s32.totalorder %v362, %v853
        %vm900 = vcmp.eq.s32.totalorder %v362, %v854
        %vm901 = vcmp.eq.s32.totalorder %v363, %v853
        %vm902 = vcmp.eq.s32.totalorder %v363, %v854
        %vm903 = vcmp.eq.s32.totalorder %v364, %v853
        %vm904 = vcmp.eq.s32.totalorder %v364, %v854
        %vm905 = vcmp.eq.s32.totalorder %v365, %v853
        %vm906 = vcmp.eq.s32.totalorder %v365, %v854
        %vm907 = vcmp.eq.s32.totalorder %v366, %v853
        %vm908 = vcmp.eq.s32.totalorder %v366, %v854
        %vm909 = vcmp.eq.s32.totalorder %v367, %v853
        %vm910 = vcmp.eq.s32.totalorder %v367, %v854
        %vm911 = vcmp.eq.s32.totalorder %v368, %v853
        %vm912 = vcmp.eq.s32.totalorder %v368, %v854
        %vm913 = vcmp.eq.s32.totalorder %v369, %v853
        %vm914 = vcmp.eq.s32.totalorder %v369, %v854
        %vm915 = vcmp.eq.s32.totalorder %v370, %v853
        %vm916 = vcmp.eq.s32.totalorder %v370, %v854
        %vm917 = vcmp.eq.s32.totalorder %v371, %v853
        %vm918 = vcmp.eq.s32.totalorder %v371, %v854
        %vm919 = vmand %vm855, %vm399
        %vm920 = vmand %vm856, %vm400
        %vm921 = vmand %vm857, %vm399
        %vm922 = vmand %vm858, %vm400
        %vm923 = vmand %vm859, %vm399
        %vm924 = vmand %vm860, %vm400
        %vm925 = vmand %vm861, %vm399
        %vm926 = vmand %vm862, %vm400
        %vm927 = vmand %vm863, %vm399
        %vm928 = vmand %vm864, %vm400
        %vm929 = vmand %vm865, %vm399
        %vm930 = vmand %vm866, %vm400
        %vm931 = vmand %vm867, %vm399
        %vm932 = vmand %vm868, %vm400
        %vm933 = vmand %vm869, %vm399
        %vm934 = vmand %vm870, %vm400
        %vm935 = vmand %vm871, %vm399
        %vm936 = vmand %vm872, %vm400
        %vm937 = vmand %vm873, %vm399
        %vm938 = vmand %vm874, %vm400
        %vm939 = vmand %vm875, %vm399
        %vm940 = vmand %vm876, %vm400
        %vm941 = vmand %vm877, %vm399
        %vm942 = vmand %vm878, %vm400
        %vm943 = vmand %vm879, %vm399
        %vm944 = vmand %vm880, %vm400
        %vm945 = vmand %vm881, %vm399
        %vm946 = vmand %vm882, %vm400
        %vm947 = vmand %vm883, %vm399
        %vm948 = vmand %vm884, %vm400
        %vm949 = vmand %vm885, %vm399
        %vm950 = vmand %vm886, %vm400
        %vm951 = vmand %vm887, %vm399
        %vm952 = vmand %vm888, %vm400
        %vm953 = vmand %vm889, %vm399
        %vm954 = vmand %vm890, %vm400
        %vm955 = vmand %vm891, %vm399
        %vm956 = vmand %vm892, %vm400
        %vm957 = vmand %vm893, %vm399
        %vm958 = vmand %vm894, %vm400
        %vm959 = vmand %vm895, %vm399
        %vm960 = vmand %vm896, %vm400
        %vm961 = vmand %vm897, %vm399
        %vm962 = vmand %vm898, %vm400
        %vm963 = vmand %vm899, %vm399
        %vm964 = vmand %vm900, %vm400
        %vm965 = vmand %vm901, %vm399
        %vm966 = vmand %vm902, %vm400
        %vm967 = vmand %vm903, %vm399
        %vm968 = vmand %vm904, %vm400
        %vm969 = vmand %vm905, %vm399
        %vm970 = vmand %vm906, %vm400
        %vm971 = vmand %vm907, %vm399
        %vm972 = vmand %vm908, %vm400
        %vm973 = vmand %vm909, %vm399
        %vm974 = vmand %vm910, %vm400
        %vm975 = vmand %vm911, %vm399
        %vm976 = vmand %vm912, %vm400
        %vm977 = vmand %vm913, %vm399
        %vm978 = vmand %vm914, %vm400
        %vm979 = vmand %vm915, %vm399
        %vm980 = vmand %vm916, %vm400
        %vm981 = vmand %vm917, %vm399
        %vm982 = vmand %vm918, %vm400
        %v983 = vsel %vm919, 1, 0
        %v984 = vsel %vm920, 1, 0
        %v985 = vsel %vm921, 1, 0
        %v986 = vsel %vm922, 1, 0
        %v987 = vsel %vm923, 1, 0
        %v988 = vsel %vm924, 1, 0
        %v989 = vsel %vm925, 1, 0
        %v990 = vsel %vm926, 1, 0
        %v991 = vsel %vm927, 1, 0
        %v992 = vsel %vm928, 1, 0
        %v993 = vsel %vm929, 1, 0
        %v994 = vsel %vm930, 1, 0
        %v995 = vsel %vm931, 1, 0
        %v996 = vsel %vm932, 1, 0
        %v997 = vsel %vm933, 1, 0
        %v998 = vsel %vm934, 1, 0
        %v999 = vsel %vm935, 1, 0
        %v1000 = vsel %vm936, 1, 0
        %v1001 = vsel %vm937, 1, 0
        %v1002 = vsel %vm938, 1, 0
        %v1003 = vsel %vm939, 1, 0
        %v1004 = vsel %vm940, 1, 0
        %v1005 = vsel %vm941, 1, 0
        %v1006 = vsel %vm942, 1, 0
        %v1007 = vsel %vm943, 1, 0
        %v1008 = vsel %vm944, 1, 0
        %v1009 = vsel %vm945, 1, 0
        %v1010 = vsel %vm946, 1, 0
        %v1011 = vsel %vm947, 1, 0
        %v1012 = vsel %vm948, 1, 0
        %v1013 = vsel %vm949, 1, 0
        %v1014 = vsel %vm950, 1, 0
        %v1015 = vsel %vm951, 1, 0
        %v1016 = vsel %vm952, 1, 0
        %v1017 = vsel %vm953, 1, 0
        %v1018 = vsel %vm954, 1, 0
        %v1019 = vsel %vm955, 1, 0
        %v1020 = vsel %vm956, 1, 0
        %v1021 = vsel %vm957, 1, 0
        %v1022 = vsel %vm958, 1, 0
        %v1023 = vsel %vm959, 1, 0
        %v1024 = vsel %vm960, 1, 0
        %v1025 = vsel %vm961, 1, 0
        %v1026 = vsel %vm962, 1, 0
        %v1027 = vsel %vm963, 1, 0
        %v1028 = vsel %vm964, 1, 0
        %v1029 = vsel %vm965, 1, 0
        %v1030 = vsel %vm966, 1, 0
        %v1031 = vsel %vm967, 1, 0
        %v1032 = vsel %vm968, 1, 0
        %v1033 = vsel %vm969, 1, 0
        %v1034 = vsel %vm970, 1, 0
        %v1035 = vsel %vm971, 1, 0
        %v1036 = vsel %vm972, 1, 0
        %v1037 = vsel %vm973, 1, 0
        %v1038 = vsel %vm974, 1, 0
        %v1039 = vsel %vm975, 1, 0
        %v1040 = vsel %vm976, 1, 0
        %v1041 = vsel %vm977, 1, 0
        %v1042 = vsel %vm978, 1, 0
        %v1043 = vsel %vm979, 1, 0
        %v1044 = vsel %vm980, 1, 0
        %v1045 = vsel %vm981, 1, 0
        %v1046 = vsel %vm982, 1, 0
        %v1047 = vcvt.s32.f32 %v983
        %v1048 = vcvt.s32.f32 %v984
        %v1049 = vcvt.s32.f32 %v985
        %v1050 = vcvt.s32.f32 %v986
        %v1051 = vcvt.s32.f32 %v987
        %v1052 = vcvt.s32.f32 %v988
        %v1053 = vcvt.s32.f32 %v989
        %v1054 = vcvt.s32.f32 %v990
        %v1055 = vcvt.s32.f32 %v991
        %v1056 = vcvt.s32.f32 %v992
        %v1057 = vcvt.s32.f32 %v993
        %v1058 = vcvt.s32.f32 %v994
        %v1059 = vcvt.s32.f32 %v995
        %v1060 = vcvt.s32.f32 %v996
        %v1061 = vcvt.s32.f32 %v997
        %v1062 = vcvt.s32.f32 %v998
        %v1063 = vcvt.s32.f32 %v999
        %v1064 = vcvt.s32.f32 %v1000
        %v1065 = vcvt.s32.f32 %v1001
        %v1066 = vcvt.s32.f32 %v1002
        %v1067 = vcvt.s32.f32 %v1003
        %v1068 = vcvt.s32.f32 %v1004
        %v1069 = vcvt.s32.f32 %v1005
        %v1070 = vcvt.s32.f32 %v1006
        %v1071 = vcvt.s32.f32 %v1007
        %v1072 = vcvt.s32.f32 %v1008
        %v1073 = vcvt.s32.f32 %v1009
        %v1074 = vcvt.s32.f32 %v1010
        %v1075 = vcvt.s32.f32 %v1011
        %v1076 = vcvt.s32.f32 %v1012
        %v1077 = vcvt.s32.f32 %v1013
        %v1078 = vcvt.s32.f32 %v1014
        %v1079 = vcvt.s32.f32 %v1015
        %v1080 = vcvt.s32.f32 %v1016
        %v1081 = vcvt.s32.f32 %v1017
        %v1082 = vcvt.s32.f32 %v1018
        %v1083 = vcvt.s32.f32 %v1019
        %v1084 = vcvt.s32.f32 %v1020
        %v1085 = vcvt.s32.f32 %v1021
        %v1086 = vcvt.s32.f32 %v1022
        %v1087 = vcvt.s32.f32 %v1023
        %v1088 = vcvt.s32.f32 %v1024
        %v1089 = vcvt.s32.f32 %v1025
        %v1090 = vcvt.s32.f32 %v1026
        %v1091 = vcvt.s32.f32 %v1027
        %v1092 = vcvt.s32.f32 %v1028
        %v1093 = vcvt.s32.f32 %v1029
        %v1094 = vcvt.s32.f32 %v1030
        %v1095 = vcvt.s32.f32 %v1031
        %v1096 = vcvt.s32.f32 %v1032
        %v1097 = vcvt.s32.f32 %v1033
        %v1098 = vcvt.s32.f32 %v1034
        %v1099 = vcvt.s32.f32 %v1035
        %v1100 = vcvt.s32.f32 %v1036
        %v1101 = vcvt.s32.f32 %v1037
        %v1102 = vcvt.s32.f32 %v1038
        %v1103 = vcvt.s32.f32 %v1039
        %v1104 = vcvt.s32.f32 %v1040
        %v1105 = vcvt.s32.f32 %v1041
        %v1106 = vcvt.s32.f32 %v1042
        %v1107 = vcvt.s32.f32 %v1043
        %v1108 = vcvt.s32.f32 %v1044
        %v1109 = vcvt.s32.f32 %v1045
        %v1110 = vcvt.s32.f32 %v1046
        %v1111 = vld [vmem:[%s338] sm:$0x3]
        %v1113 = vperm.slane %v1111, 0
        %v1114 = vperm.slane %v1111, 1
        %1117 = vmatpush.msra.mxu0 %v625
        %1118 = vmatpush.msra.mxu0 %v623
        %1119 = vmatpush.msra.mxu0 %v621
        %1120 = vmatpush.msra.mxu0 %v619
        %1121 = vmatpush.msra.mxu0 %v617
        %1122 = vmatpush.msra.mxu0 %v615
        %1123 = vmatpush.msra.mxu0 %v613
        %1124 = vmatpush.msra.mxu0 %v611
        %1125 = vmatpush.msra.mxu0 %v609
        %1126 = vmatpush.msra.mxu0 %v607
        %1127 = vmatpush.msra.mxu0 %v605
        %1128 = vmatpush.msra.mxu0 %v603
        %1129 = vmatpush.msra.mxu0 %v601
        %1130 = vmatpush.msra.mxu0 %v599
        %1131 = vmatpush.msra.mxu0 %v597
        %1132 = vmatpush.msra.mxu0 %v595
        %1133 = vmatmul.f32.gmra.mxu0 %v1113
        %v1134 = vpop.f32.mrf.mxu0
        %v1135 = vadd.f32 0.0, %v1134
        %1136 = vdwg.mxu0
        %1137 = vmatpush.msra.mxu0 %v657
        %1138 = vmatpush.msra.mxu0 %v655
        %1139 = vmatpush.msra.mxu0 %v653
        %1140 = vmatpush.msra.mxu0 %v651
        %1141 = vmatpush.msra.mxu0 %v649
        %1142 = vmatpush.msra.mxu0 %v647
        %1143 = vmatpush.msra.mxu0 %v645
        %1144 = vmatpush.msra.mxu0 %v643
        %1145 = vmatpush.msra.mxu0 %v641
        %1146 = vmatpush.msra.mxu0 %v639
        %1147 = vmatpush.msra.mxu0 %v637
        %1148 = vmatpush.msra.mxu0 %v635
        %1149 = vmatpush.msra.mxu0 %v633
        %1150 = vmatpush.msra.mxu0 %v631
        %1151 = vmatpush.msra.mxu0 %v629
        %1152 = vmatpush.msra.mxu0 %v627
        %1153 = vmatmul.f32.gmra.mxu0 %v1114
        %v1154 = vpop.f32.mrf.mxu0
        %v1155 = vadd.f32 %v1135, %v1154
        %1156 = vdwg.mxu0
        %1157 = vmatpush.msra.mxu0 %v626
        %1158 = vmatpush.msra.mxu0 %v624
        %1159 = vmatpush.msra.mxu0 %v622
        %1160 = vmatpush.msra.mxu0 %v620
        %1161 = vmatpush.msra.mxu0 %v618
        %1162 = vmatpush.msra.mxu0 %v616
        %1163 = vmatpush.msra.mxu0 %v614
        %1164 = vmatpush.msra.mxu0 %v612
        %1165 = vmatpush.msra.mxu0 %v610
        %1166 = vmatpush.msra.mxu0 %v608
        %1167 = vmatpush.msra.mxu0 %v606
        %1168 = vmatpush.msra.mxu0 %v604
        %1169 = vmatpush.msra.mxu0 %v602
        %1170 = vmatpush.msra.mxu0 %v600
        %1171 = vmatpush.msra.mxu0 %v598
        %1172 = vmatpush.msra.mxu0 %v596
        %1173 = vmatmul.f32.gmra.mxu0 %v1113
        %v1174 = vpop.f32.mrf.mxu0
        %v1175 = vadd.f32 0.0, %v1174
        %1176 = vdwg.mxu0
        %1177 = vmatpush.msra.mxu0 %v658
        %1178 = vmatpush.msra.mxu0 %v656
        %1179 = vmatpush.msra.mxu0 %v654
        %1180 = vmatpush.msra.mxu0 %v652
        %1181 = vmatpush.msra.mxu0 %v650
        %1182 = vmatpush.msra.mxu0 %v648
        %1183 = vmatpush.msra.mxu0 %v646
        %1184 = vmatpush.msra.mxu0 %v644
        %1185 = vmatpush.msra.mxu0 %v642
        %1186 = vmatpush.msra.mxu0 %v640
        %1187 = vmatpush.msra.mxu0 %v638
        %1188 = vmatpush.msra.mxu0 %v636
        %1189 = vmatpush.msra.mxu0 %v634
        %1190 = vmatpush.msra.mxu0 %v632
        %1191 = vmatpush.msra.mxu0 %v630
        %1192 = vmatpush.msra.mxu0 %v628
        %1193 = vmatmul.f32.gmra.mxu0 %v1114
        %v1194 = vpop.f32.mrf.mxu0
        %v1195 = vadd.f32 %v1175, %v1194
        %1196 = vdwg.mxu0
        %1197 = vmatpush.msra.mxu0 %v819
        %1198 = vmatpush.msra.mxu0 %v817
        %1199 = vmatpush.msra.mxu0 %v815
        %1200 = vmatpush.msra.mxu0 %v813
        %1201 = vmatpush.msra.mxu0 %v811
        %1202 = vmatpush.msra.mxu0 %v809
        %1203 = vmatpush.msra.mxu0 %v807
        %1204 = vmatpush.msra.mxu0 %v805
        %1205 = vmatpush.msra.mxu0 %v803
        %1206 = vmatpush.msra.mxu0 %v801
        %1207 = vmatpush.msra.mxu0 %v799
        %1208 = vmatpush.msra.mxu0 %v797
        %1209 = vmatpush.msra.mxu0 %v795
        %1210 = vmatpush.msra.mxu0 %v793
        %1211 = vmatpush.msra.mxu0 %v791
        %1212 = vmatpush.msra.mxu0 %v789
        %1213 = vmatmul.f32.gmra.mxu0 %v1113
        %v1214 = vpop.f32.mrf.mxu0
        %v1215 = vadd.f32 0.0, %v1214
        %1216 = vdwg.mxu0
        %1217 = vmatpush.msra.mxu0 %v851
        %1218 = vmatpush.msra.mxu0 %v849
        %1219 = vmatpush.msra.mxu0 %v847
        %1220 = vmatpush.msra.mxu0 %v845
        %1221 = vmatpush.msra.mxu0 %v843
        %1222 = vmatpush.msra.mxu0 %v841
        %1223 = vmatpush.msra.mxu0 %v839
        %1224 = vmatpush.msra.mxu0 %v837
        %1225 = vmatpush.msra.mxu0 %v835
        %1226 = vmatpush.msra.mxu0 %v833
        %1227 = vmatpush.msra.mxu0 %v831
        %1228 = vmatpush.msra.mxu0 %v829
        %1229 = vmatpush.msra.mxu0 %v827
        %1230 = vmatpush.msra.mxu0 %v825
        %1231 = vmatpush.msra.mxu0 %v823
        %1232 = vmatpush.msra.mxu0 %v821
        %1233 = vmatmul.f32.gmra.mxu0 %v1114
        %v1234 = vpop.f32.mrf.mxu0
        %v1235 = vadd.f32 %v1215, %v1234
        %1236 = vdwg.mxu0
        %1237 = vmatpush.msra.mxu0 %v820
        %1238 = vmatpush.msra.mxu0 %v818
        %1239 = vmatpush.msra.mxu0 %v816
        %1240 = vmatpush.msra.mxu0 %v814
        %1241 = vmatpush.msra.mxu0 %v812
        %1242 = vmatpush.msra.mxu0 %v810
        %1243 = vmatpush.msra.mxu0 %v808
        %1244 = vmatpush.msra.mxu0 %v806
        %1245 = vmatpush.msra.mxu0 %v804
        %1246 = vmatpush.msra.mxu0 %v802
        %1247 = vmatpush.msra.mxu0 %v800
        %1248 = vmatpush.msra.mxu0 %v798
        %1249 = vmatpush.msra.mxu0 %v796
        %1250 = vmatpush.msra.mxu0 %v794
        %1251 = vmatpush.msra.mxu0 %v792
        %1252 = vmatpush.msra.mxu0 %v790
        %1253 = vmatmul.f32.gmra.mxu0 %v1113
        %v1254 = vpop.f32.mrf.mxu0
        %v1255 = vadd.f32 0.0, %v1254
        %1256 = vdwg.mxu0
        %1257 = vmatpush.msra.mxu0 %v852
        %1258 = vmatpush.msra.mxu0 %v850
        %1259 = vmatpush.msra.mxu0 %v848
        %1260 = vmatpush.msra.mxu0 %v846
        %1261 = vmatpush.msra.mxu0 %v844
        %1262 = vmatpush.msra.mxu0 %v842
        %1263 = vmatpush.msra.mxu0 %v840
        %1264 = vmatpush.msra.mxu0 %v838
        %1265 = vmatpush.msra.mxu0 %v836
        %1266 = vmatpush.msra.mxu0 %v834
        %1267 = vmatpush.msra.mxu0 %v832
        %1268 = vmatpush.msra.mxu0 %v830
        %1269 = vmatpush.msra.mxu0 %v828
        %1270 = vmatpush.msra.mxu0 %v826
        %1271 = vmatpush.msra.mxu0 %v824
        %1272 = vmatpush.msra.mxu0 %v822
        %1273 = vmatmul.f32.gmra.mxu0 %v1114
        %v1274 = vpop.f32.mrf.mxu0
        %v1275 = vadd.f32 %v1255, %v1274
        %1276 = vdwg.mxu0
        %1277 = vmatpush.msra.mxu0 %v1077
        %1278 = vmatpush.msra.mxu0 %v1075
        %1279 = vmatpush.msra.mxu0 %v1073
        %1280 = vmatpush.msra.mxu0 %v1071
        %1281 = vmatpush.msra.mxu0 %v1069
        %1282 = vmatpush.msra.mxu0 %v1067
        %1283 = vmatpush.msra.mxu0 %v1065
        %1284 = vmatpush.msra.mxu0 %v1063
        %1285 = vmatpush.msra.mxu0 %v1061
        %1286 = vmatpush.msra.mxu0 %v1059
        %1287 = vmatpush.msra.mxu0 %v1057
        %1288 = vmatpush.msra.mxu0 %v1055
        %1289 = vmatpush.msra.mxu0 %v1053
        %1290 = vmatpush.msra.mxu0 %v1051
        %1291 = vmatpush.msra.mxu0 %v1049
        %1292 = vmatpush.msra.mxu0 %v1047
        %1293 = vmatmul.f32.gmra.mxu0 %v1113
        %v1294 = vpop.f32.mrf.mxu0
        %v1295 = vadd.f32 0.0, %v1294
        %1296 = vdwg.mxu0
        %1297 = vmatpush.msra.mxu0 %v1109
        %1298 = vmatpush.msra.mxu0 %v1107
        %1299 = vmatpush.msra.mxu0 %v1105
        %1300 = vmatpush.msra.mxu0 %v1103
        %1301 = vmatpush.msra.mxu0 %v1101
        %1302 = vmatpush.msra.mxu0 %v1099
        %1303 = vmatpush.msra.mxu0 %v1097
        %1304 = vmatpush.msra.mxu0 %v1095
        %1305 = vmatpush.msra.mxu0 %v1093
        %1306 = vmatpush.msra.mxu0 %v1091
        %1307 = vmatpush.msra.mxu0 %v1089
        %1308 = vmatpush.msra.mxu0 %v1087
        %1309 = vmatpush.msra.mxu0 %v1085
        %1310 = vmatpush.msra.mxu0 %v1083
        %1311 = vmatpush.msra.mxu0 %v1081
        %1312 = vmatpush.msra.mxu0 %v1079
        %1313 = vmatmul.f32.gmra.mxu0 %v1114
        %v1314 = vpop.f32.mrf.mxu0
        %v1315 = vadd.f32 %v1295, %v1314
        %1316 = vdwg.mxu0
        %1317 = vmatpush.msra.mxu0 %v1078
        %1318 = vmatpush.msra.mxu0 %v1076
        %1319 = vmatpush.msra.mxu0 %v1074
        %1320 = vmatpush.msra.mxu0 %v1072
        %1321 = vmatpush.msra.mxu0 %v1070
        %1322 = vmatpush.msra.mxu0 %v1068
        %1323 = vmatpush.msra.mxu0 %v1066
        %1324 = vmatpush.msra.mxu0 %v1064
        %1325 = vmatpush.msra.mxu0 %v1062
        %1326 = vmatpush.msra.mxu0 %v1060
        %1327 = vmatpush.msra.mxu0 %v1058
        %1328 = vmatpush.msra.mxu0 %v1056
        %1329 = vmatpush.msra.mxu0 %v1054
        %1330 = vmatpush.msra.mxu0 %v1052
        %1331 = vmatpush.msra.mxu0 %v1050
        %1332 = vmatpush.msra.mxu0 %v1048
        %1333 = vmatmul.f32.gmra.mxu0 %v1113
        %v1334 = vpop.f32.mrf.mxu0
        %v1335 = vadd.f32 0.0, %v1334
        %1336 = vdwg.mxu0
        %1337 = vmatpush.msra.mxu0 %v1110
        %1338 = vmatpush.msra.mxu0 %v1108
        %1339 = vmatpush.msra.mxu0 %v1106
        %1340 = vmatpush.msra.mxu0 %v1104
        %1341 = vmatpush.msra.mxu0 %v1102
        %1342 = vmatpush.msra.mxu0 %v1100
        %1343 = vmatpush.msra.mxu0 %v1098
        %1344 = vmatpush.msra.mxu0 %v1096
        %1345 = vmatpush.msra.mxu0 %v1094
        %1346 = vmatpush.msra.mxu0 %v1092
        %1347 = vmatpush.msra.mxu0 %v1090
        %1348 = vmatpush.msra.mxu0 %v1088
        %1349 = vmatpush.msra.mxu0 %v1086
        %1350 = vmatpush.msra.mxu0 %v1084
        %1351 = vmatpush.msra.mxu0 %v1082
        %1352 = vmatpush.msra.mxu0 %v1080
        %1353 = vmatmul.f32.gmra.mxu0 %v1114
        %v1354 = vpop.f32.mrf.mxu0
        %v1355 = vadd.f32 %v1335, %v1354
        %1356 = vdwg.mxu0
        %v1359 = vrot.slane %v1155, 7
        %v1360 = vrot.slane %v1195, 7
        %v1365 = vrot.slane %v1235, 6
        %v1366 = vrot.slane %v1275, 6
        %v1371 = vrot.slane %v1315, 5
        %v1372 = vrot.slane %v1355, 5
        %vm1375 = vcmask 1040384
        %v1376 = vsel %vm1375, %v1113, %v1359
        %v1377 = vsel %vm1375, %v1114, %v1360
        %vm1378 = vcmask 1041408
        %v1379 = vsel %vm1378, %v1376, %v1365
        %v1380 = vsel %vm1378, %v1377, %v1366
        %vm1381 = vcmask 1042432
        %v1382 = vsel %vm1381, %v1379, %v1371
        %v1383 = vsel %vm1381, %v1380, %v1372
        %v1384 = vld [vmem:[#allocation2] sm:$0xff]
        %v1385 = vld [vmem:[#allocation2 + $0x8] sm:$0xff]
        %v1386 = vld [vmem:[#allocation2 + $0x10] sm:$0xff]
        %v1387 = vld [vmem:[#allocation2 + $0x18] sm:$0xff]
        %v1388 = vld [vmem:[%s2] sm:$0xff]
        %v1389 = vld [vmem:[%s2 + $0x8] sm:$0xff]
        %v1390 = vld [vmem:[%s2 + $0x10] sm:$0xff]
        %v1391 = vld [vmem:[%s2 + $0x18] sm:$0xff]
        %1393 = vset.pattern.permute.xlu0 0
        %1394 = vperm.xlu0 %1393, %v1388
        %v1395 = vpop.permute.xlu0 %1394
        %1398 = vset.pattern.permute.xlu0 0
        %1399 = vperm.xlu0 %1398, %v1389
        %v1400 = vpop.permute.xlu0 %1399
        %1403 = vset.pattern.permute.xlu0 0
        %1404 = vperm.xlu0 %1403, %v1390
        %v1405 = vpop.permute.xlu0 %1404
        %1408 = vset.pattern.permute.xlu0 0
        %1409 = vperm.xlu0 %1408, %v1391
        %v1410 = vpop.permute.xlu0 %1409
        %vm1412 = vcmask 31744
        %v1414 = vsel %vm1412, %v1384, 0
        %v1417 = vsel %vm1412, %v1385, 0
        %v1420 = vsel %vm1412, %v1386, 0
        %v1423 = vsel %vm1412, %v1387, 0
        %vm1425 = vcmask 1043456
        %v1427 = vsel %vm1425, %v1382, 0
        %v1430 = vsel %vm1425, %v1383, 0
        %1432 = vmatpush.msra.mxu0 0.0
        %1433 = vmatpush.msra.mxu0 0.0
        %1434 = vmatpush.msra.mxu0 0.0
        %1435 = vmatpush.msra.mxu0 0.0
        %1436 = vmatpush.msra.mxu0 0.0
        %1437 = vmatpush.msra.mxu0 0.0
        %1438 = vmatpush.msra.mxu0 0.0
        %1439 = vmatpush.msra.mxu0 0.0
        %1440 = vmatpush.msra.mxu0 0.0
        %1441 = vmatpush.msra.mxu0 0.0
        %1442 = vmatpush.msra.mxu0 0.0
        %1443 = vmatpush.msra.mxu0 0.0
        %1444 = vmatpush.msra.mxu0 0.0
        %1445 = vmatpush.msra.mxu0 0.0
        %1446 = vmatpush.msra.mxu0 0.0
        %1447 = vmatpush.msra.mxu0 %v1427
        %1448 = vmatmul.f32.gmra.mxu0 %v1414
        %v1449 = vpop.f32.mrf.mxu0
        %v1450 = vadd.f32 %v1395, %v1449
        %1451 = vmatmul.f32.gmra.mxu0 %v1417
        %v1452 = vpop.f32.mrf.mxu0
        %v1453 = vadd.f32 %v1400, %v1452
        %1454 = vmatmul.f32.gmra.mxu0 %v1420
        %v1455 = vpop.f32.mrf.mxu0
        %v1456 = vadd.f32 %v1405, %v1455
        %1457 = vmatmul.f32.gmra.mxu0 %v1423
        %v1458 = vpop.f32.mrf.mxu0
        %v1459 = vadd.f32 %v1410, %v1458
        %1460 = vdwg.mxu0
        %1461 = vmatpush.msra.mxu0 0.0
        %1462 = vmatpush.msra.mxu0 0.0
        %1463 = vmatpush.msra.mxu0 0.0
        %1464 = vmatpush.msra.mxu0 0.0
        %1465 = vmatpush.msra.mxu0 0.0
        %1466 = vmatpush.msra.mxu0 0.0
        %1467 = vmatpush.msra.mxu0 0.0
        %1468 = vmatpush.msra.mxu0 0.0
        %1469 = vmatpush.msra.mxu0 0.0
        %1470 = vmatpush.msra.mxu0 0.0
        %1471 = vmatpush.msra.mxu0 0.0
        %1472 = vmatpush.msra.mxu0 0.0
        %1473 = vmatpush.msra.mxu0 0.0
        %1474 = vmatpush.msra.mxu0 0.0
        %1475 = vmatpush.msra.mxu0 0.0
        %1476 = vmatpush.msra.mxu0 %v1430
        %1477 = vmatmul.f32.gmra.mxu0 %v1414
        %v1478 = vpop.f32.mrf.mxu0
        %v1479 = vadd.f32 %v1395, %v1478
        %1480 = vmatmul.f32.gmra.mxu0 %v1417
        %v1481 = vpop.f32.mrf.mxu0
        %v1482 = vadd.f32 %v1400, %v1481
        %1483 = vmatmul.f32.gmra.mxu0 %v1420
        %v1484 = vpop.f32.mrf.mxu0
        %v1485 = vadd.f32 %v1405, %v1484
        %1486 = vmatmul.f32.gmra.mxu0 %v1423
        %v1487 = vpop.f32.mrf.mxu0
        %v1488 = vadd.f32 %v1410, %v1487
        %1489 = vdwg.mxu0
        %1490 = vmatpush.msra.mxu0 %v625
        %1491 = vmatpush.msra.mxu0 %v623
        %1492 = vmatpush.msra.mxu0 %v621
        %1493 = vmatpush.msra.mxu0 %v619
        %1494 = vmatpush.msra.mxu0 %v617
        %1495 = vmatpush.msra.mxu0 %v615
        %1496 = vmatpush.msra.mxu0 %v613
        %1497 = vmatpush.msra.mxu0 %v611
        %1498 = vmatpush.msra.mxu0 %v609
        %1499 = vmatpush.msra.mxu0 %v607
        %1500 = vmatpush.msra.mxu0 %v605
        %1501 = vmatpush.msra.mxu0 %v603
        %1502 = vmatpush.msra.mxu0 %v601
        %1503 = vmatpush.msra.mxu0 %v599
        %1504 = vmatpush.msra.mxu0 %v597
        %1505 = vmatpush.msra.mxu0 %v595
        %1506 = vmatmul.f32.gmra.mxu0 %v1450
        %v1507 = vpop.f32.mrf.mxu0
        %v1508 = vadd.f32 0.0, %v1507
        %1509 = vmatmul.f32.gmra.mxu0 %v1453
        %v1510 = vpop.f32.mrf.mxu0
        %v1511 = vadd.f32 0.0, %v1510
        %1512 = vmatmul.f32.gmra.mxu0 %v1456
        %v1513 = vpop.f32.mrf.mxu0
        %v1514 = vadd.f32 0.0, %v1513
        %1515 = vmatmul.f32.gmra.mxu0 %v1459
        %v1516 = vpop.f32.mrf.mxu0
        %v1517 = vadd.f32 0.0, %v1516
        %1518 = vdwg.mxu0
        %1519 = vmatpush.msra.mxu0 %v657
        %1520 = vmatpush.msra.mxu0 %v655
        %1521 = vmatpush.msra.mxu0 %v653
        %1522 = vmatpush.msra.mxu0 %v651
        %1523 = vmatpush.msra.mxu0 %v649
        %1524 = vmatpush.msra.mxu0 %v647
        %1525 = vmatpush.msra.mxu0 %v645
        %1526 = vmatpush.msra.mxu0 %v643
        %1527 = vmatpush.msra.mxu0 %v641
        %1528 = vmatpush.msra.mxu0 %v639
        %1529 = vmatpush.msra.mxu0 %v637
        %1530 = vmatpush.msra.mxu0 %v635
        %1531 = vmatpush.msra.mxu0 %v633
        %1532 = vmatpush.msra.mxu0 %v631
        %1533 = vmatpush.msra.mxu0 %v629
        %1534 = vmatpush.msra.mxu0 %v627
        %1535 = vmatmul.f32.gmra.mxu0 %v1479
        %v1536 = vpop.f32.mrf.mxu0
        %v1537 = vadd.f32 %v1508, %v1536
        %1538 = vmatmul.f32.gmra.mxu0 %v1482
        %v1539 = vpop.f32.mrf.mxu0
        %v1540 = vadd.f32 %v1511, %v1539
        %1541 = vmatmul.f32.gmra.mxu0 %v1485
        %v1542 = vpop.f32.mrf.mxu0
        %v1543 = vadd.f32 %v1514, %v1542
        %1544 = vmatmul.f32.gmra.mxu0 %v1488
        %v1545 = vpop.f32.mrf.mxu0
        %v1546 = vadd.f32 %v1517, %v1545
        %1547 = vdwg.mxu0
        %1548 = vmatpush.msra.mxu0 %v626
        %1549 = vmatpush.msra.mxu0 %v624
        %1550 = vmatpush.msra.mxu0 %v622
        %1551 = vmatpush.msra.mxu0 %v620
        %1552 = vmatpush.msra.mxu0 %v618
        %1553 = vmatpush.msra.mxu0 %v616
        %1554 = vmatpush.msra.mxu0 %v614
        %1555 = vmatpush.msra.mxu0 %v612
        %1556 = vmatpush.msra.mxu0 %v610
        %1557 = vmatpush.msra.mxu0 %v608
        %1558 = vmatpush.msra.mxu0 %v606
        %1559 = vmatpush.msra.mxu0 %v604
        %1560 = vmatpush.msra.mxu0 %v602
        %1561 = vmatpush.msra.mxu0 %v600
        %1562 = vmatpush.msra.mxu0 %v598
        %1563 = vmatpush.msra.mxu0 %v596
        %1564 = vmatmul.f32.gmra.mxu0 %v1450
        %v1565 = vpop.f32.mrf.mxu0
        %v1566 = vadd.f32 0.0, %v1565
        %1567 = vmatmul.f32.gmra.mxu0 %v1453
        %v1568 = vpop.f32.mrf.mxu0
        %v1569 = vadd.f32 0.0, %v1568
        %1570 = vmatmul.f32.gmra.mxu0 %v1456
        %v1571 = vpop.f32.mrf.mxu0
        %v1572 = vadd.f32 0.0, %v1571
        %1573 = vmatmul.f32.gmra.mxu0 %v1459
        %v1574 = vpop.f32.mrf.mxu0
        %v1575 = vadd.f32 0.0, %v1574
        %1576 = vdwg.mxu0
        %1577 = vmatpush.msra.mxu0 %v658
        %1578 = vmatpush.msra.mxu0 %v656
        %1579 = vmatpush.msra.mxu0 %v654
        %1580 = vmatpush.msra.mxu0 %v652
        %1581 = vmatpush.msra.mxu0 %v650
        %1582 = vmatpush.msra.mxu0 %v648
        %1583 = vmatpush.msra.mxu0 %v646
        %1584 = vmatpush.msra.mxu0 %v644
        %1585 = vmatpush.msra.mxu0 %v642
        %1586 = vmatpush.msra.mxu0 %v640
        %1587 = vmatpush.msra.mxu0 %v638
        %1588 = vmatpush.msra.mxu0 %v636
        %1589 = vmatpush.msra.mxu0 %v634
        %1590 = vmatpush.msra.mxu0 %v632
        %1591 = vmatpush.msra.mxu0 %v630
        %1592 = vmatpush.msra.mxu0 %v628
        %1593 = vmatmul.f32.gmra.mxu0 %v1479
        %v1594 = vpop.f32.mrf.mxu0
        %v1595 = vadd.f32 %v1566, %v1594
        %1596 = vmatmul.f32.gmra.mxu0 %v1482
        %v1597 = vpop.f32.mrf.mxu0
        %v1598 = vadd.f32 %v1569, %v1597
        %1599 = vmatmul.f32.gmra.mxu0 %v1485
        %v1600 = vpop.f32.mrf.mxu0
        %v1601 = vadd.f32 %v1572, %v1600
        %1602 = vmatmul.f32.gmra.mxu0 %v1488
        %v1603 = vpop.f32.mrf.mxu0
        %v1604 = vadd.f32 %v1575, %v1603
        %1605 = vdwg.mxu0
        %1606 = vmatpush.msra.mxu0 %v819
        %1607 = vmatpush.msra.mxu0 %v817
        %1608 = vmatpush.msra.mxu0 %v815
        %1609 = vmatpush.msra.mxu0 %v813
        %1610 = vmatpush.msra.mxu0 %v811
        %1611 = vmatpush.msra.mxu0 %v809
        %1612 = vmatpush.msra.mxu0 %v807
        %1613 = vmatpush.msra.mxu0 %v805
        %1614 = vmatpush.msra.mxu0 %v803
        %1615 = vmatpush.msra.mxu0 %v801
        %1616 = vmatpush.msra.mxu0 %v799
        %1617 = vmatpush.msra.mxu0 %v797
        %1618 = vmatpush.msra.mxu0 %v795
        %1619 = vmatpush.msra.mxu0 %v793
        %1620 = vmatpush.msra.mxu0 %v791
        %1621 = vmatpush.msra.mxu0 %v789
        %1622 = vmatmul.f32.gmra.mxu0 %v1450
        %v1623 = vpop.f32.mrf.mxu0
        %v1624 = vadd.f32 0.0, %v1623
        %1625 = vmatmul.f32.gmra.mxu0 %v1453
        %v1626 = vpop.f32.mrf.mxu0
        %v1627 = vadd.f32 0.0, %v1626
        %1628 = vmatmul.f32.gmra.mxu0 %v1456
        %v1629 = vpop.f32.mrf.mxu0
        %v1630 = vadd.f32 0.0, %v1629
        %1631 = vmatmul.f32.gmra.mxu0 %v1459
        %v1632 = vpop.f32.mrf.mxu0
        %v1633 = vadd.f32 0.0, %v1632
        %1634 = vdwg.mxu0
        %1635 = vmatpush.msra.mxu0 %v851
        %1636 = vmatpush.msra.mxu0 %v849
        %1637 = vmatpush.msra.mxu0 %v847
        %1638 = vmatpush.msra.mxu0 %v845
        %1639 = vmatpush.msra.mxu0 %v843
        %1640 = vmatpush.msra.mxu0 %v841
        %1641 = vmatpush.msra.mxu0 %v839
        %1642 = vmatpush.msra.mxu0 %v837
        %1643 = vmatpush.msra.mxu0 %v835
        %1644 = vmatpush.msra.mxu0 %v833
        %1645 = vmatpush.msra.mxu0 %v831
        %1646 = vmatpush.msra.mxu0 %v829
        %1647 = vmatpush.msra.mxu0 %v827
        %1648 = vmatpush.msra.mxu0 %v825
        %1649 = vmatpush.msra.mxu0 %v823
        %1650 = vmatpush.msra.mxu0 %v821
        %1651 = vmatmul.f32.gmra.mxu0 %v1479
        %v1652 = vpop.f32.mrf.mxu0
        %v1653 = vadd.f32 %v1624, %v1652
        %1654 = vmatmul.f32.gmra.mxu0 %v1482
        %v1655 = vpop.f32.mrf.mxu0
        %v1656 = vadd.f32 %v1627, %v1655
        %1657 = vmatmul.f32.gmra.mxu0 %v1485
        %v1658 = vpop.f32.mrf.mxu0
        %v1659 = vadd.f32 %v1630, %v1658
        %1660 = vmatmul.f32.gmra.mxu0 %v1488
        %v1661 = vpop.f32.mrf.mxu0
        %v1662 = vadd.f32 %v1633, %v1661
        %1663 = vdwg.mxu0
        %1664 = vmatpush.msra.mxu0 %v820
        %1665 = vmatpush.msra.mxu0 %v818
        %1666 = vmatpush.msra.mxu0 %v816
        %1667 = vmatpush.msra.mxu0 %v814
        %1668 = vmatpush.msra.mxu0 %v812
        %1669 = vmatpush.msra.mxu0 %v810
        %1670 = vmatpush.msra.mxu0 %v808
        %1671 = vmatpush.msra.mxu0 %v806
        %1672 = vmatpush.msra.mxu0 %v804
        %1673 = vmatpush.msra.mxu0 %v802
        %1674 = vmatpush.msra.mxu0 %v800
        %1675 = vmatpush.msra.mxu0 %v798
        %1676 = vmatpush.msra.mxu0 %v796
        %1677 = vmatpush.msra.mxu0 %v794
        %1678 = vmatpush.msra.mxu0 %v792
        %1679 = vmatpush.msra.mxu0 %v790
        %1680 = vmatmul.f32.gmra.mxu0 %v1450
        %v1681 = vpop.f32.mrf.mxu0
        %v1682 = vadd.f32 0.0, %v1681
        %1683 = vmatmul.f32.gmra.mxu0 %v1453
        %v1684 = vpop.f32.mrf.mxu0
        %v1685 = vadd.f32 0.0, %v1684
        %1686 = vmatmul.f32.gmra.mxu0 %v1456
        %v1687 = vpop.f32.mrf.mxu0
        %v1688 = vadd.f32 0.0, %v1687
        %1689 = vmatmul.f32.gmra.mxu0 %v1459
        %v1690 = vpop.f32.mrf.mxu0
        %v1691 = vadd.f32 0.0, %v1690
        %1692 = vdwg.mxu0
        %1693 = vmatpush.msra.mxu0 %v852
        %1694 = vmatpush.msra.mxu0 %v850
        %1695 = vmatpush.msra.mxu0 %v848
        %1696 = vmatpush.msra.mxu0 %v846
        %1697 = vmatpush.msra.mxu0 %v844
        %1698 = vmatpush.msra.mxu0 %v842
        %1699 = vmatpush.msra.mxu0 %v840
        %1700 = vmatpush.msra.mxu0 %v838
        %1701 = vmatpush.msra.mxu0 %v836
        %1702 = vmatpush.msra.mxu0 %v834
        %1703 = vmatpush.msra.mxu0 %v832
        %1704 = vmatpush.msra.mxu0 %v830
        %1705 = vmatpush.msra.mxu0 %v828
        %1706 = vmatpush.msra.mxu0 %v826
        %1707 = vmatpush.msra.mxu0 %v824
        %1708 = vmatpush.msra.mxu0 %v822
        %1709 = vmatmul.f32.gmra.mxu0 %v1479
        %v1710 = vpop.f32.mrf.mxu0
        %v1711 = vadd.f32 %v1682, %v1710
        %1712 = vmatmul.f32.gmra.mxu0 %v1482
        %v1713 = vpop.f32.mrf.mxu0
        %v1714 = vadd.f32 %v1685, %v1713
        %1715 = vmatmul.f32.gmra.mxu0 %v1485
        %v1716 = vpop.f32.mrf.mxu0
        %v1717 = vadd.f32 %v1688, %v1716
        %1718 = vmatmul.f32.gmra.mxu0 %v1488
        %v1719 = vpop.f32.mrf.mxu0
        %v1720 = vadd.f32 %v1691, %v1719
        %1721 = vdwg.mxu0
        %1722 = vmatpush.msra.mxu0 %v1077
        %1723 = vmatpush.msra.mxu0 %v1075
        %1724 = vmatpush.msra.mxu0 %v1073
        %1725 = vmatpush.msra.mxu0 %v1071
        %1726 = vmatpush.msra.mxu0 %v1069
        %1727 = vmatpush.msra.mxu0 %v1067
        %1728 = vmatpush.msra.mxu0 %v1065
        %1729 = vmatpush.msra.mxu0 %v1063
        %1730 = vmatpush.msra.mxu0 %v1061
        %1731 = vmatpush.msra.mxu0 %v1059
        %1732 = vmatpush.msra.mxu0 %v1057
        %1733 = vmatpush.msra.mxu0 %v1055
        %1734 = vmatpush.msra.mxu0 %v1053
        %1735 = vmatpush.msra.mxu0 %v1051
        %1736 = vmatpush.msra.mxu0 %v1049
        %1737 = vmatpush.msra.mxu0 %v1047
        %1738 = vmatmul.f32.gmra.mxu0 %v1450
        %v1739 = vpop.f32.mrf.mxu0
        %v1740 = vadd.f32 0.0, %v1739
        %1741 = vmatmul.f32.gmra.mxu0 %v1453
        %v1742 = vpop.f32.mrf.mxu0
        %v1743 = vadd.f32 0.0, %v1742
        %1744 = vmatmul.f32.gmra.mxu0 %v1456
        %v1745 = vpop.f32.mrf.mxu0
        %v1746 = vadd.f32 0.0, %v1745
        %1747 = vmatmul.f32.gmra.mxu0 %v1459
        %v1748 = vpop.f32.mrf.mxu0
        %v1749 = vadd.f32 0.0, %v1748
        %1750 = vdwg.mxu0
        %1751 = vmatpush.msra.mxu0 %v1109
        %1752 = vmatpush.msra.mxu0 %v1107
        %1753 = vmatpush.msra.mxu0 %v1105
        %1754 = vmatpush.msra.mxu0 %v1103
        %1755 = vmatpush.msra.mxu0 %v1101
        %1756 = vmatpush.msra.mxu0 %v1099
        %1757 = vmatpush.msra.mxu0 %v1097
        %1758 = vmatpush.msra.mxu0 %v1095
        %1759 = vmatpush.msra.mxu0 %v1093
        %1760 = vmatpush.msra.mxu0 %v1091
        %1761 = vmatpush.msra.mxu0 %v1089
        %1762 = vmatpush.msra.mxu0 %v1087
        %1763 = vmatpush.msra.mxu0 %v1085
        %1764 = vmatpush.msra.mxu0 %v1083
        %1765 = vmatpush.msra.mxu0 %v1081
        %1766 = vmatpush.msra.mxu0 %v1079
        %1767 = vmatmul.f32.gmra.mxu0 %v1479
        %v1768 = vpop.f32.mrf.mxu0
        %v1769 = vadd.f32 %v1740, %v1768
        %1770 = vmatmul.f32.gmra.mxu0 %v1482
        %v1771 = vpop.f32.mrf.mxu0
        %v1772 = vadd.f32 %v1743, %v1771
        %1773 = vmatmul.f32.gmra.mxu0 %v1485
        %v1774 = vpop.f32.mrf.mxu0
        %v1775 = vadd.f32 %v1746, %v1774
        %1776 = vmatmul.f32.gmra.mxu0 %v1488
        %v1777 = vpop.f32.mrf.mxu0
        %v1778 = vadd.f32 %v1749, %v1777
        %1779 = vdwg.mxu0
        %1780 = vmatpush.msra.mxu0 %v1078
        %1781 = vmatpush.msra.mxu0 %v1076
        %1782 = vmatpush.msra.mxu0 %v1074
        %1783 = vmatpush.msra.mxu0 %v1072
        %1784 = vmatpush.msra.mxu0 %v1070
        %1785 = vmatpush.msra.mxu0 %v1068
        %1786 = vmatpush.msra.mxu0 %v1066
        %1787 = vmatpush.msra.mxu0 %v1064
        %1788 = vmatpush.msra.mxu0 %v1062
        %1789 = vmatpush.msra.mxu0 %v1060
        %1790 = vmatpush.msra.mxu0 %v1058
        %1791 = vmatpush.msra.mxu0 %v1056
        %1792 = vmatpush.msra.mxu0 %v1054
        %1793 = vmatpush.msra.mxu0 %v1052
        %1794 = vmatpush.msra.mxu0 %v1050
        %1795 = vmatpush.msra.mxu0 %v1048
        %1796 = vmatmul.f32.gmra.mxu0 %v1450
        %v1797 = vpop.f32.mrf.mxu0
        %v1798 = vadd.f32 0.0, %v1797
        %1799 = vmatmul.f32.gmra.mxu0 %v1453
        %v1800 = vpop.f32.mrf.mxu0
        %v1801 = vadd.f32 0.0, %v1800
        %1802 = vmatmul.f32.gmra.mxu0 %v1456
        %v1803 = vpop.f32.mrf.mxu0
        %v1804 = vadd.f32 0.0, %v1803
        %1805 = vmatmul.f32.gmra.mxu0 %v1459
        %v1806 = vpop.f32.mrf.mxu0
        %v1807 = vadd.f32 0.0, %v1806
        %1808 = vdwg.mxu0
        %1809 = vmatpush.msra.mxu0 %v1110
        %1810 = vmatpush.msra.mxu0 %v1108
        %1811 = vmatpush.msra.mxu0 %v1106
        %1812 = vmatpush.msra.mxu0 %v1104
        %1813 = vmatpush.msra.mxu0 %v1102
        %1814 = vmatpush.msra.mxu0 %v1100
        %1815 = vmatpush.msra.mxu0 %v1098
        %1816 = vmatpush.msra.mxu0 %v1096
        %1817 = vmatpush.msra.mxu0 %v1094
        %1818 = vmatpush.msra.mxu0 %v1092
        %1819 = vmatpush.msra.mxu0 %v1090
        %1820 = vmatpush.msra.mxu0 %v1088
        %1821 = vmatpush.msra.mxu0 %v1086
        %1822 = vmatpush.msra.mxu0 %v1084
        %1823 = vmatpush.msra.mxu0 %v1082
        %1824 = vmatpush.msra.mxu0 %v1080
        %1825 = vmatmul.f32.gmra.mxu0 %v1479
        %v1826 = vpop.f32.mrf.mxu0
        %v1827 = vadd.f32 %v1798, %v1826
        %1828 = vmatmul.f32.gmra.mxu0 %v1482
        %v1829 = vpop.f32.mrf.mxu0
        %v1830 = vadd.f32 %v1801, %v1829
        %1831 = vmatmul.f32.gmra.mxu0 %v1485
        %v1832 = vpop.f32.mrf.mxu0
        %v1833 = vadd.f32 %v1804, %v1832
        %1834 = vmatmul.f32.gmra.mxu0 %v1488
        %v1835 = vpop.f32.mrf.mxu0
        %v1836 = vadd.f32 %v1807, %v1835
        %1837 = vdwg.mxu0
        %v1838 = vld [vmem:[#allocation5] sm:$0xff]
        %v1839 = vld [vmem:[#allocation5 + $0x8] sm:$0xff]
        %v1840 = vld [vmem:[#allocation7] sm:$0xff]
        %v1841 = vld [vmem:[#allocation7 + $0x8] sm:$0xff]
        %1843 = vset.pattern.permute.xlu0 0
        %1844 = vperm.xlu0 %1843, %v1840
        %v1845 = vpop.permute.xlu0 %1844
        %1848 = vset.pattern.permute.xlu0 0
        %1849 = vperm.xlu0 %1848, %v1841
        %v1850 = vpop.permute.xlu0 %1849
        %1852 = vmatpush.msra.mxu0 %v1778
        %1853 = vmatpush.msra.mxu0 %v1775
        %1854 = vmatpush.msra.mxu0 %v1772
        %1855 = vmatpush.msra.mxu0 %v1769
        %1856 = vmatpush.msra.mxu0 %v1662
        %1857 = vmatpush.msra.mxu0 %v1659
        %1858 = vmatpush.msra.mxu0 %v1656
        %1859 = vmatpush.msra.mxu0 %v1653
        %1860 = vmatpush.msra.mxu0 %v1546
        %1861 = vmatpush.msra.mxu0 %v1543
        %1862 = vmatpush.msra.mxu0 %v1540
        %1863 = vmatpush.msra.mxu0 %v1537
        %1864 = vmatpush.msra.mxu0 %v1459
        %1865 = vmatpush.msra.mxu0 %v1456
        %1866 = vmatpush.msra.mxu0 %v1453
        %1867 = vmatpush.msra.mxu0 %v1450
        %1868 = vmatmul.f32.gmra.mxu0 %v1838
        %v1869 = vpop.f32.mrf.mxu0
        %v1870 = vadd.f32 %v1845, %v1869
        %1871 = vmatmul.f32.gmra.mxu0 %v1839
        %v1872 = vpop.f32.mrf.mxu0
        %v1873 = vadd.f32 %v1850, %v1872
        %1874 = vdwg.mxu0
        %1875 = vmatpush.msra.mxu0 %v1836
        %1876 = vmatpush.msra.mxu0 %v1833
        %1877 = vmatpush.msra.mxu0 %v1830
        %1878 = vmatpush.msra.mxu0 %v1827
        %1879 = vmatpush.msra.mxu0 %v1720
        %1880 = vmatpush.msra.mxu0 %v1717
        %1881 = vmatpush.msra.mxu0 %v1714
        %1882 = vmatpush.msra.mxu0 %v1711
        %1883 = vmatpush.msra.mxu0 %v1604
        %1884 = vmatpush.msra.mxu0 %v1601
        %1885 = vmatpush.msra.mxu0 %v1598
        %1886 = vmatpush.msra.mxu0 %v1595
        %1887 = vmatpush.msra.mxu0 %v1488
        %1888 = vmatpush.msra.mxu0 %v1485
        %1889 = vmatpush.msra.mxu0 %v1482
        %1890 = vmatpush.msra.mxu0 %v1479
        %1891 = vmatmul.f32.gmra.mxu0 %v1838
        %v1892 = vpop.f32.mrf.mxu0
        %v1893 = vadd.f32 %v1845, %v1892
        %1894 = vmatmul.f32.gmra.mxu0 %v1839
        %v1895 = vpop.f32.mrf.mxu0
        %v1896 = vadd.f32 %v1850, %v1895
        %1897 = vdwg.mxu0
        %1898 = vmatpush.msra.mxu0 %v625
        %1899 = vmatpush.msra.mxu0 %v623
        %1900 = vmatpush.msra.mxu0 %v621
        %1901 = vmatpush.msra.mxu0 %v619
        %1902 = vmatpush.msra.mxu0 %v617
        %1903 = vmatpush.msra.mxu0 %v615
        %1904 = vmatpush.msra.mxu0 %v613
        %1905 = vmatpush.msra.mxu0 %v611
        %1906 = vmatpush.msra.mxu0 %v609
        %1907 = vmatpush.msra.mxu0 %v607
        %1908 = vmatpush.msra.mxu0 %v605
        %1909 = vmatpush.msra.mxu0 %v603
        %1910 = vmatpush.msra.mxu0 %v601
        %1911 = vmatpush.msra.mxu0 %v599
        %1912 = vmatpush.msra.mxu0 %v597
        %1913 = vmatpush.msra.mxu0 %v595
        %1914 = vmatmul.f32.gmra.mxu0 %v1870
        %v1915 = vpop.f32.mrf.mxu0
        %v1916 = vadd.f32 0.0, %v1915
        %1917 = vmatmul.f32.gmra.mxu0 %v1873
        %v1918 = vpop.f32.mrf.mxu0
        %v1919 = vadd.f32 0.0, %v1918
        %1920 = vdwg.mxu0
        %1921 = vmatpush.msra.mxu0 %v657
        %1922 = vmatpush.msra.mxu0 %v655
        %1923 = vmatpush.msra.mxu0 %v653
        %1924 = vmatpush.msra.mxu0 %v651
        %1925 = vmatpush.msra.mxu0 %v649
        %1926 = vmatpush.msra.mxu0 %v647
        %1927 = vmatpush.msra.mxu0 %v645
        %1928 = vmatpush.msra.mxu0 %v643
        %1929 = vmatpush.msra.mxu0 %v641
        %1930 = vmatpush.msra.mxu0 %v639
        %1931 = vmatpush.msra.mxu0 %v637
        %1932 = vmatpush.msra.mxu0 %v635
        %1933 = vmatpush.msra.mxu0 %v633
        %1934 = vmatpush.msra.mxu0 %v631
        %1935 = vmatpush.msra.mxu0 %v629
        %1936 = vmatpush.msra.mxu0 %v627
        %1937 = vmatmul.f32.gmra.mxu0 %v1893
        %v1938 = vpop.f32.mrf.mxu0
        %v1939 = vadd.f32 %v1916, %v1938
        %1940 = vmatmul.f32.gmra.mxu0 %v1896
        %v1941 = vpop.f32.mrf.mxu0
        %v1942 = vadd.f32 %v1919, %v1941
        %1943 = vdwg.mxu0
        %1944 = vmatpush.msra.mxu0 %v626
        %1945 = vmatpush.msra.mxu0 %v624
        %1946 = vmatpush.msra.mxu0 %v622
        %1947 = vmatpush.msra.mxu0 %v620
        %1948 = vmatpush.msra.mxu0 %v618
        %1949 = vmatpush.msra.mxu0 %v616
        %1950 = vmatpush.msra.mxu0 %v614
        %1951 = vmatpush.msra.mxu0 %v612
        %1952 = vmatpush.msra.mxu0 %v610
        %1953 = vmatpush.msra.mxu0 %v608
        %1954 = vmatpush.msra.mxu0 %v606
        %1955 = vmatpush.msra.mxu0 %v604
        %1956 = vmatpush.msra.mxu0 %v602
        %1957 = vmatpush.msra.mxu0 %v600
        %1958 = vmatpush.msra.mxu0 %v598
        %1959 = vmatpush.msra.mxu0 %v596
        %1960 = vmatmul.f32.gmra.mxu0 %v1870
        %v1961 = vpop.f32.mrf.mxu0
        %v1962 = vadd.f32 0.0, %v1961
        %1963 = vmatmul.f32.gmra.mxu0 %v1873
        %v1964 = vpop.f32.mrf.mxu0
        %v1965 = vadd.f32 0.0, %v1964
        %1966 = vdwg.mxu0
        %1967 = vmatpush.msra.mxu0 %v658
        %1968 = vmatpush.msra.mxu0 %v656
        %1969 = vmatpush.msra.mxu0 %v654
        %1970 = vmatpush.msra.mxu0 %v652
        %1971 = vmatpush.msra.mxu0 %v650
        %1972 = vmatpush.msra.mxu0 %v648
        %1973 = vmatpush.msra.mxu0 %v646
        %1974 = vmatpush.msra.mxu0 %v644
        %1975 = vmatpush.msra.mxu0 %v642
        %1976 = vmatpush.msra.mxu0 %v640
        %1977 = vmatpush.msra.mxu0 %v638
        %1978 = vmatpush.msra.mxu0 %v636
        %1979 = vmatpush.msra.mxu0 %v634
        %1980 = vmatpush.msra.mxu0 %v632
        %1981 = vmatpush.msra.mxu0 %v630
        %1982 = vmatpush.msra.mxu0 %v628
        %1983 = vmatmul.f32.gmra.mxu0 %v1893
        %v1984 = vpop.f32.mrf.mxu0
        %v1985 = vadd.f32 %v1962, %v1984
        %1986 = vmatmul.f32.gmra.mxu0 %v1896
        %v1987 = vpop.f32.mrf.mxu0
        %v1988 = vadd.f32 %v1965, %v1987
        %1989 = vdwg.mxu0
        %1990 = vmatpush.msra.mxu0 %v819
        %1991 = vmatpush.msra.mxu0 %v817
        %1992 = vmatpush.msra.mxu0 %v815
        %1993 = vmatpush.msra.mxu0 %v813
        %1994 = vmatpush.msra.mxu0 %v811
        %1995 = vmatpush.msra.mxu0 %v809
        %1996 = vmatpush.msra.mxu0 %v807
        %1997 = vmatpush.msra.mxu0 %v805
        %1998 = vmatpush.msra.mxu0 %v803
        %1999 = vmatpush.msra.mxu0 %v801
        %2000 = vmatpush.msra.mxu0 %v799
        %2001 = vmatpush.msra.mxu0 %v797
        %2002 = vmatpush.msra.mxu0 %v795
        %2003 = vmatpush.msra.mxu0 %v793
        %2004 = vmatpush.msra.mxu0 %v791
        %2005 = vmatpush.msra.mxu0 %v789
        %2006 = vmatmul.f32.gmra.mxu0 %v1870
        %v2007 = vpop.f32.mrf.mxu0
        %v2008 = vadd.f32 0.0, %v2007
        %2009 = vmatmul.f32.gmra.mxu0 %v1873
        %v2010 = vpop.f32.mrf.mxu0
        %v2011 = vadd.f32 0.0, %v2010
        %2012 = vdwg.mxu0
        %2013 = vmatpush.msra.mxu0 %v851
        %2014 = vmatpush.msra.mxu0 %v849
        %2015 = vmatpush.msra.mxu0 %v847
        %2016 = vmatpush.msra.mxu0 %v845
        %2017 = vmatpush.msra.mxu0 %v843
        %2018 = vmatpush.msra.mxu0 %v841
        %2019 = vmatpush.msra.mxu0 %v839
        %2020 = vmatpush.msra.mxu0 %v837
        %2021 = vmatpush.msra.mxu0 %v835
        %2022 = vmatpush.msra.mxu0 %v833
        %2023 = vmatpush.msra.mxu0 %v831
        %2024 = vmatpush.msra.mxu0 %v829
        %2025 = vmatpush.msra.mxu0 %v827
        %2026 = vmatpush.msra.mxu0 %v825
        %2027 = vmatpush.msra.mxu0 %v823
        %2028 = vmatpush.msra.mxu0 %v821
        %2029 = vmatmul.f32.gmra.mxu0 %v1893
        %v2030 = vpop.f32.mrf.mxu0
        %v2031 = vadd.f32 %v2008, %v2030
        %2032 = vmatmul.f32.gmra.mxu0 %v1896
        %v2033 = vpop.f32.mrf.mxu0
        %v2034 = vadd.f32 %v2011, %v2033
        %2035 = vdwg.mxu0
        %2036 = vmatpush.msra.mxu0 %v820
        %2037 = vmatpush.msra.mxu0 %v818
        %2038 = vmatpush.msra.mxu0 %v816
        %2039 = vmatpush.msra.mxu0 %v814
        %2040 = vmatpush.msra.mxu0 %v812
        %2041 = vmatpush.msra.mxu0 %v810
        %2042 = vmatpush.msra.mxu0 %v808
        %2043 = vmatpush.msra.mxu0 %v806
        %2044 = vmatpush.msra.mxu0 %v804
        %2045 = vmatpush.msra.mxu0 %v802
        %2046 = vmatpush.msra.mxu0 %v800
        %2047 = vmatpush.msra.mxu0 %v798
        %2048 = vmatpush.msra.mxu0 %v796
        %2049 = vmatpush.msra.mxu0 %v794
        %2050 = vmatpush.msra.mxu0 %v792
        %2051 = vmatpush.msra.mxu0 %v790
        %2052 = vmatmul.f32.gmra.mxu0 %v1870
        %v2053 = vpop.f32.mrf.mxu0
        %v2054 = vadd.f32 0.0, %v2053
        %2055 = vmatmul.f32.gmra.mxu0 %v1873
        %v2056 = vpop.f32.mrf.mxu0
        %v2057 = vadd.f32 0.0, %v2056
        %2058 = vdwg.mxu0
        %2059 = vmatpush.msra.mxu0 %v852
        %2060 = vmatpush.msra.mxu0 %v850
        %2061 = vmatpush.msra.mxu0 %v848
        %2062 = vmatpush.msra.mxu0 %v846
        %2063 = vmatpush.msra.mxu0 %v844
        %2064 = vmatpush.msra.mxu0 %v842
        %2065 = vmatpush.msra.mxu0 %v840
        %2066 = vmatpush.msra.mxu0 %v838
        %2067 = vmatpush.msra.mxu0 %v836
        %2068 = vmatpush.msra.mxu0 %v834
        %2069 = vmatpush.msra.mxu0 %v832
        %2070 = vmatpush.msra.mxu0 %v830
        %2071 = vmatpush.msra.mxu0 %v828
        %2072 = vmatpush.msra.mxu0 %v826
        %2073 = vmatpush.msra.mxu0 %v824
        %2074 = vmatpush.msra.mxu0 %v822
        %2075 = vmatmul.f32.gmra.mxu0 %v1893
        %v2076 = vpop.f32.mrf.mxu0
        %v2077 = vadd.f32 %v2054, %v2076
        %2078 = vmatmul.f32.gmra.mxu0 %v1896
        %v2079 = vpop.f32.mrf.mxu0
        %v2080 = vadd.f32 %v2057, %v2079
        %2081 = vdwg.mxu0
        %2082 = vmatpush.msra.mxu0 %v1077
        %2083 = vmatpush.msra.mxu0 %v1075
        %2084 = vmatpush.msra.mxu0 %v1073
        %2085 = vmatpush.msra.mxu0 %v1071
        %2086 = vmatpush.msra.mxu0 %v1069
        %2087 = vmatpush.msra.mxu0 %v1067
        %2088 = vmatpush.msra.mxu0 %v1065
        %2089 = vmatpush.msra.mxu0 %v1063
        %2090 = vmatpush.msra.mxu0 %v1061
        %2091 = vmatpush.msra.mxu0 %v1059
        %2092 = vmatpush.msra.mxu0 %v1057
        %2093 = vmatpush.msra.mxu0 %v1055
        %2094 = vmatpush.msra.mxu0 %v1053
        %2095 = vmatpush.msra.mxu0 %v1051
        %2096 = vmatpush.msra.mxu0 %v1049
        %2097 = vmatpush.msra.mxu0 %v1047
        %2098 = vmatmul.f32.gmra.mxu0 %v1870
        %v2099 = vpop.f32.mrf.mxu0
        %v2100 = vadd.f32 0.0, %v2099
        %2101 = vmatmul.f32.gmra.mxu0 %v1873
        %v2102 = vpop.f32.mrf.mxu0
        %v2103 = vadd.f32 0.0, %v2102
        %2104 = vdwg.mxu0
        %2105 = vmatpush.msra.mxu0 %v1109
        %2106 = vmatpush.msra.mxu0 %v1107
        %2107 = vmatpush.msra.mxu0 %v1105
        %2108 = vmatpush.msra.mxu0 %v1103
        %2109 = vmatpush.msra.mxu0 %v1101
        %2110 = vmatpush.msra.mxu0 %v1099
        %2111 = vmatpush.msra.mxu0 %v1097
        %2112 = vmatpush.msra.mxu0 %v1095
        %2113 = vmatpush.msra.mxu0 %v1093
        %2114 = vmatpush.msra.mxu0 %v1091
        %2115 = vmatpush.msra.mxu0 %v1089
        %2116 = vmatpush.msra.mxu0 %v1087
        %2117 = vmatpush.msra.mxu0 %v1085
        %2118 = vmatpush.msra.mxu0 %v1083
        %2119 = vmatpush.msra.mxu0 %v1081
        %2120 = vmatpush.msra.mxu0 %v1079
        %2121 = vmatmul.f32.gmra.mxu0 %v1893
        %v2122 = vpop.f32.mrf.mxu0
        %v2123 = vadd.f32 %v2100, %v2122
        %2124 = vmatmul.f32.gmra.mxu0 %v1896
        %v2125 = vpop.f32.mrf.mxu0
        %v2126 = vadd.f32 %v2103, %v2125
        %2127 = vdwg.mxu0
        %2128 = vmatpush.msra.mxu0 %v1078
        %2129 = vmatpush.msra.mxu0 %v1076
        %2130 = vmatpush.msra.mxu0 %v1074
        %2131 = vmatpush.msra.mxu0 %v1072
        %2132 = vmatpush.msra.mxu0 %v1070
        %2133 = vmatpush.msra.mxu0 %v1068
        %2134 = vmatpush.msra.mxu0 %v1066
        %2135 = vmatpush.msra.mxu0 %v1064
        %2136 = vmatpush.msra.mxu0 %v1062
        %2137 = vmatpush.msra.mxu0 %v1060
        %2138 = vmatpush.msra.mxu0 %v1058
        %2139 = vmatpush.msra.mxu0 %v1056
        %2140 = vmatpush.msra.mxu0 %v1054
        %2141 = vmatpush.msra.mxu0 %v1052
        %2142 = vmatpush.msra.mxu0 %v1050
        %2143 = vmatpush.msra.mxu0 %v1048
        %2144 = vmatmul.f32.gmra.mxu0 %v1870
        %v2145 = vpop.f32.mrf.mxu0
        %v2146 = vadd.f32 0.0, %v2145
        %2147 = vmatmul.f32.gmra.mxu0 %v1873
        %v2148 = vpop.f32.mrf.mxu0
        %v2149 = vadd.f32 0.0, %v2148
        %2150 = vdwg.mxu0
        %2151 = vmatpush.msra.mxu0 %v1110
        %2152 = vmatpush.msra.mxu0 %v1108
        %2153 = vmatpush.msra.mxu0 %v1106
        %2154 = vmatpush.msra.mxu0 %v1104
        %2155 = vmatpush.msra.mxu0 %v1102
        %2156 = vmatpush.msra.mxu0 %v1100
        %2157 = vmatpush.msra.mxu0 %v1098
        %2158 = vmatpush.msra.mxu0 %v1096
        %2159 = vmatpush.msra.mxu0 %v1094
        %2160 = vmatpush.msra.mxu0 %v1092
        %2161 = vmatpush.msra.mxu0 %v1090
        %2162 = vmatpush.msra.mxu0 %v1088
        %2163 = vmatpush.msra.mxu0 %v1086
        %2164 = vmatpush.msra.mxu0 %v1084
        %2165 = vmatpush.msra.mxu0 %v1082
        %2166 = vmatpush.msra.mxu0 %v1080
        %2167 = vmatmul.f32.gmra.mxu0 %v1893
        %v2168 = vpop.f32.mrf.mxu0
        %v2169 = vadd.f32 %v2146, %v2168
        %2170 = vmatmul.f32.gmra.mxu0 %v1896
        %v2171 = vpop.f32.mrf.mxu0
        %v2172 = vadd.f32 %v2149, %v2171
        %2173 = vdwg.mxu0
        %v2174 = vld [vmem:[#allocation8] sm:$0xff]
        %v2175 = vld [vmem:[%s6] sm:$0xff]
        %2177 = vset.pattern.permute.xlu0 0
        %2178 = vperm.xlu0 %2177, %v2175
        %v2179 = vpop.permute.xlu0 %2178
        %vm2181 = vcmask 523264
        %v2183 = vsel %vm2181, %v2174, 0
        %2185 = vmatpush.msra.mxu0 0.0
        %2186 = vmatpush.msra.mxu0 0.0
        %2187 = vmatpush.msra.mxu0 0.0
        %2188 = vmatpush.msra.mxu0 0.0
        %2189 = vmatpush.msra.mxu0 0.0
        %2190 = vmatpush.msra.mxu0 0.0
        %2191 = vmatpush.msra.mxu0 0.0
        %2192 = vmatpush.msra.mxu0 0.0
        %2193 = vmatpush.msra.mxu0 %v2126
        %2194 = vmatpush.msra.mxu0 %v2123
        %2195 = vmatpush.msra.mxu0 %v2034
        %2196 = vmatpush.msra.mxu0 %v2031
        %2197 = vmatpush.msra.mxu0 %v1942
        %2198 = vmatpush.msra.mxu0 %v1939
        %2199 = vmatpush.msra.mxu0 %v1873
        %2200 = vmatpush.msra.mxu0 %v1870
        %2201 = vmatmul.f32.gmra.mxu0 %v2183
        %v2202 = vpop.f32.mrf.mxu0
        %v2203 = vadd.f32 %v2179, %v2202
        %2204 = vdwg.mxu0
        %2205 = vmatpush.msra.mxu0 0.0
        %2206 = vmatpush.msra.mxu0 0.0
        %2207 = vmatpush.msra.mxu0 0.0
        %2208 = vmatpush.msra.mxu0 0.0
        %2209 = vmatpush.msra.mxu0 0.0
        %2210 = vmatpush.msra.mxu0 0.0
        %2211 = vmatpush.msra.mxu0 0.0
        %2212 = vmatpush.msra.mxu0 0.0
        %2213 = vmatpush.msra.mxu0 %v2172
        %2214 = vmatpush.msra.mxu0 %v2169
        %2215 = vmatpush.msra.mxu0 %v2080
        %2216 = vmatpush.msra.mxu0 %v2077
        %2217 = vmatpush.msra.mxu0 %v1988
        %2218 = vmatpush.msra.mxu0 %v1985
        %2219 = vmatpush.msra.mxu0 %v1896
        %2220 = vmatpush.msra.mxu0 %v1893
        %2221 = vmatmul.f32.gmra.mxu0 %v2183
        %v2222 = vpop.f32.mrf.mxu0
        %v2223 = vadd.f32 %v2179, %v2222
        %2224 = vdwg.mxu0
        %v2225 = vxor.u32 %v2203, 2147483648
        %v2226 = vxor.u32 %v2223, 2147483648
        %v2227 = vmul.f32 %v2225, 1.442695
        %v2228 = vpow.pop %v2227
        %v2229 = vmul.f32 %v2226, 1.442695
        %v2230 = vpow.pop %v2229
        %v2231 = vadd.f32 %v2228, 1.0
        %v2232 = vadd.f32 %v2230, 1.0
        %v2233 = vrcp.pop %v2231
        %v2234 = vmul.f32 %v2231, %v2233
        %v2235 = vsub.f32 1.0, %v2234
        %v2236 = vmul.f32 %v2233, %v2235
        %v2237 = vadd.f32 %v2233, %v2236
        %vm2238 = vweird.f32 %v2231
        %vm2239 = vweird.f32 %v2233
        %vm2240 = vmor %vm2238, %vm2239
        %v2241 = vsel %vm2240, %v2233, %v2237
        %v2242 = vand.u32 2147483647, %v2231
        %vm2243 = vcmp.eq.f32.partialorder %v2242, 8.507059e+37
        %v2244 = vand.u32 %v2231, 2147483648
        %v2245 = vor.u32 1.1754944e-38, %v2244
        %v2246 = vsel %vm2243, %v2245, %v2241
        %v2247 = vmul.f32 1.0, %v2246
        %v2248 = vrcp.pop %v2232
        %v2249 = vmul.f32 %v2232, %v2248
        %v2250 = vsub.f32 1.0, %v2249
        %v2251 = vmul.f32 %v2248, %v2250
        %v2252 = vadd.f32 %v2248, %v2251
        %vm2253 = vweird.f32 %v2232
        %vm2254 = vweird.f32 %v2248
        %vm2255 = vmor %vm2253, %vm2254
        %v2256 = vsel %vm2255, %v2248, %v2252
        %v2257 = vand.u32 2147483647, %v2232
        %vm2258 = vcmp.eq.f32.partialorder %v2257, 8.507059e+37
        %v2259 = vand.u32 %v2232, 2147483648
        %v2260 = vor.u32 1.1754944e-38, %v2259
        %v2261 = vsel %vm2258, %v2260, %v2256
        %v2262 = vmul.f32 1.0, %v2261
        %v2263 = vrot.slane %v2247, 4
        %v2264 = vadd.f32 %v2247, %v2263
        %v2265 = vrot.slane %v2264, 2
        %v2266 = vadd.f32 %v2264, %v2265
        %v2267 = vrot.slane %v2266, 1
        %v2268 = vadd.f32 %v2266, %v2267
        %v2269 = vrot.slane %v2262, 4
        %v2270 = vadd.f32 %v2262, %v2269
        %v2271 = vrot.slane %v2270, 2
        %v2272 = vadd.f32 %v2270, %v2271
        %v2273 = vrot.slane %v2272, 1
        %v2274 = vadd.f32 %v2272, %v2273
        %v2275 = vrcp.pop 8.0
        %v2276 = vmul.f32 8.0, %v2275
        %v2277 = vsub.f32 1.0, %v2276
        %v2278 = vmul.f32 %v2275, %v2277
        %v2279 = vadd.f32 %v2275, %v2278
        %vm2280 = vweird.f32 %v2275
        %v2281 = vsel %vm2280, %v2275, %v2279
        %v2282 = vmul.f32 %v2268, %v2281
        %v2283 = vmul.f32 %v2274, %v2281
        %v2284 = vsub.f32 %v2247, %v2282
        %v2285 = vsub.f32 %v2262, %v2283
        %v2286 = vmul.f32 %v2284, %v2284
        %v2287 = vmul.f32 %v2285, %v2285
        %v2288 = vrot.slane %v2286, 4
        %v2289 = vadd.f32 %v2286, %v2288
        %v2290 = vrot.slane %v2289, 2
        %v2291 = vadd.f32 %v2289, %v2290
        %v2292 = vrot.slane %v2291, 1
        %v2293 = vadd.f32 %v2291, %v2292
        %v2294 = vrot.slane %v2287, 4
        %v2295 = vadd.f32 %v2287, %v2294
        %v2296 = vrot.slane %v2295, 2
        %v2297 = vadd.f32 %v2295, %v2296
        %v2298 = vrot.slane %v2297, 1
        %v2299 = vadd.f32 %v2297, %v2298
        %v2300 = vrsqrt.pop %v2293
        %v2301 = vmul.f32 %v2300, %v2293
        %v2302 = vmul.f32 %v2301, %v2300
        %v2303 = vmul.f32 0.5, %v2302
        %v2304 = vsub.f32 1.5, %v2303
        %v2305 = vmul.f32 %v2300, %v2304
        %v2306 = vmul.f32 %v2293, %v2305
        %vm2307 = vcmp.eq.f32.partialorder %v2293, inf
        %v2308 = vsel %vm2307, %v2293, %v2306
        %vm2309 = vcmp.eq.f32.partialorder %v2293, 0.0
        %v2310 = vand.u32 %v2293, 2147483648
        %v2311 = vsel %vm2309, %v2310, %v2308
        %v2312 = vrsqrt.pop %v2299
        %v2313 = vmul.f32 %v2312, %v2299
        %v2314 = vmul.f32 %v2313, %v2312
        %v2315 = vmul.f32 0.5, %v2314
        %v2316 = vsub.f32 1.5, %v2315
        %v2317 = vmul.f32 %v2312, %v2316
        %v2318 = vmul.f32 %v2299, %v2317
        %vm2319 = vcmp.eq.f32.partialorder %v2299, inf
        %v2320 = vsel %vm2319, %v2299, %v2318
        %vm2321 = vcmp.eq.f32.partialorder %v2299, 0.0
        %v2322 = vand.u32 %v2299, 2147483648
        %v2323 = vsel %vm2321, %v2322, %v2320
        %v2324 = vrcp.pop %v2311
        %v2325 = vmul.f32 %v2311, %v2324
        %v2326 = vsub.f32 1.0, %v2325
        %v2327 = vmul.f32 %v2324, %v2326
        %v2328 = vadd.f32 %v2324, %v2327
        %vm2329 = vweird.f32 %v2311
        %vm2330 = vweird.f32 %v2324
        %vm2331 = vmor %vm2329, %vm2330
        %v2332 = vsel %vm2331, %v2324, %v2328
        %v2333 = vand.u32 2147483647, %v2311
        %vm2334 = vcmp.eq.f32.partialorder %v2333, 8.507059e+37
        %v2335 = vand.u32 %v2311, 2147483648
        %v2336 = vor.u32 1.1754944e-38, %v2335
        %v2337 = vsel %vm2334, %v2336, %v2332
        %v2338 = vmul.f32 %v2284, %v2337
        %v2339 = vrcp.pop %v2323
        %v2340 = vmul.f32 %v2323, %v2339
        %v2341 = vsub.f32 1.0, %v2340
        %v2342 = vmul.f32 %v2339, %v2341
        %v2343 = vadd.f32 %v2339, %v2342
        %vm2344 = vweird.f32 %v2323
        %vm2345 = vweird.f32 %v2339
        %vm2346 = vmor %vm2344, %vm2345
        %v2347 = vsel %vm2346, %v2339, %v2343
        %v2348 = vand.u32 2147483647, %v2323
        %vm2349 = vcmp.eq.f32.partialorder %v2348, 8.507059e+37
        %v2350 = vand.u32 %v2323, 2147483648
        %v2351 = vor.u32 1.1754944e-38, %v2350
        %v2352 = vsel %vm2349, %v2351, %v2347
        %v2353 = vmul.f32 %v2285, %v2352
        %2354 = vxpose.xlu0.b32.start [1/16] %v2338, 128
        %2355 = vxpose.xlu0.b32.cont [2/16] 0.0, 128
        %2356 = vxpose.xlu0.b32.cont [3/16] 0.0, 128
        %2357 = vxpose.xlu0.b32.cont [4/16] 0.0, 128
        %2358 = vxpose.xlu0.b32.cont [5/16] 0.0, 128
        %2359 = vxpose.xlu0.b32.cont [6/16] 0.0, 128
        %2360 = vxpose.xlu0.b32.cont [7/16] 0.0, 128
        %2361 = vxpose.xlu0.b32.cont [8/16] 0.0, 128
        %2362 = vxpose.xlu0.b32.cont [9/16] 0.0, 128
        %2363 = vxpose.xlu0.b32.cont [10/16] 0.0, 128
        %2364 = vxpose.xlu0.b32.cont [11/16] 0.0, 128
        %2365 = vxpose.xlu0.b32.cont [12/16] 0.0, 128
        %2366 = vxpose.xlu0.b32.cont [13/16] 0.0, 128
        %2367 = vxpose.xlu0.b32.cont [14/16] 0.0, 128
        %2368 = vxpose.xlu0.b32.cont [15/16] 0.0, 128
        %2369 = vxpose.xlu0.b32.end [16/16] 0.0, 128
        %v2370 = vpop.trf.xlu0
        %v2371 = vpop.trf.xlu0
        %v2372 = vpop.trf.xlu0
        %v2373 = vpop.trf.xlu0
        %v2374 = vpop.trf.xlu0
        %v2375 = vpop.trf.xlu0
        %v2376 = vpop.trf.xlu0
        %v2377 = vpop.trf.xlu0
        %v2378 = vpop.trf.xlu0
        %v2379 = vpop.trf.xlu0
        %v2380 = vpop.trf.xlu0
        %v2381 = vpop.trf.xlu0
        %v2382 = vpop.trf.xlu0
        %v2383 = vpop.trf.xlu0
        %v2384 = vpop.trf.xlu0
        %v2385 = vpop.trf.xlu0
        %2386 = vxpose.xlu0.b32.start [1/16] %v2353, 128
        %2387 = vxpose.xlu0.b32.cont [2/16] 0.0, 128
        %2388 = vxpose.xlu0.b32.cont [3/16] 0.0, 128
        %2389 = vxpose.xlu0.b32.cont [4/16] 0.0, 128
        %2390 = vxpose.xlu0.b32.cont [5/16] 0.0, 128
        %2391 = vxpose.xlu0.b32.cont [6/16] 0.0, 128
        %2392 = vxpose.xlu0.b32.cont [7/16] 0.0, 128
        %2393 = vxpose.xlu0.b32.cont [8/16] 0.0, 128
        %2394 = vxpose.xlu0.b32.cont [9/16] 0.0, 128
        %2395 = vxpose.xlu0.b32.cont [10/16] 0.0, 128
        %2396 = vxpose.xlu0.b32.cont [11/16] 0.0, 128
        %2397 = vxpose.xlu0.b32.cont [12/16] 0.0, 128
        %2398 = vxpose.xlu0.b32.cont [13/16] 0.0, 128
        %2399 = vxpose.xlu0.b32.cont [14/16] 0.0, 128
        %2400 = vxpose.xlu0.b32.cont [15/16] 0.0, 128
        %2401 = vxpose.xlu0.b32.end [16/16] 0.0, 128
        %v2402 = vpop.trf.xlu0
        %v2403 = vpop.trf.xlu0
        %v2404 = vpop.trf.xlu0
        %v2405 = vpop.trf.xlu0
        %v2406 = vpop.trf.xlu0
        %v2407 = vpop.trf.xlu0
        %v2408 = vpop.trf.xlu0
        %v2409 = vpop.trf.xlu0
        %v2410 = vpop.trf.xlu0
        %v2411 = vpop.trf.xlu0
        %v2412 = vpop.trf.xlu0
        %v2413 = vpop.trf.xlu0
        %v2414 = vpop.trf.xlu0
        %v2415 = vpop.trf.xlu0
        %v2416 = vpop.trf.xlu0
        %v2417 = vpop.trf.xlu0
        %vm2418 = vcmask 64512
        %v2420 = vsel %vm2418, %v2370, 0
        %v2423 = vsel %vm2418, %v2371, 0
        %v2426 = vsel %vm2418, %v2372, 0
        %v2429 = vsel %vm2418, %v2373, 0
        %v2432 = vsel %vm2418, %v2374, 0
        %v2435 = vsel %vm2418, %v2375, 0
        %v2438 = vsel %vm2418, %v2376, 0
        %v2441 = vsel %vm2418, %v2377, 0
        %v2444 = vsel %vm2418, %v2378, 0
        %v2447 = vsel %vm2418, %v2379, 0
        %v2450 = vsel %vm2418, %v2380, 0
        %v2453 = vsel %vm2418, %v2381, 0
        %v2456 = vsel %vm2418, %v2382, 0
        %v2459 = vsel %vm2418, %v2383, 0
        %v2462 = vsel %vm2418, %v2384, 0
        %v2465 = vsel %vm2418, %v2385, 0
        %v2468 = vsel %vm2418, %v2402, 0
        %v2471 = vsel %vm2418, %v2403, 0
        %v2474 = vsel %vm2418, %v2404, 0
        %v2477 = vsel %vm2418, %v2405, 0
        %v2480 = vsel %vm2418, %v2406, 0
        %v2483 = vsel %vm2418, %v2407, 0
        %v2486 = vsel %vm2418, %v2408, 0
        %v2489 = vsel %vm2418, %v2409, 0
        %v2492 = vsel %vm2418, %v2410, 0
        %v2495 = vsel %vm2418, %v2411, 0
        %v2498 = vsel %vm2418, %v2412, 0
        %v2501 = vsel %vm2418, %v2413, 0
        %v2504 = vsel %vm2418, %v2414, 0
        %v2507 = vsel %vm2418, %v2415, 0
        %v2510 = vsel %vm2418, %v2416, 0
        %v2513 = vsel %vm2418, %v2417, 0
        %2515 = vmatpush.msra.mxu0 0.0
        %2516 = vmatpush.msra.mxu0 0.0
        %2517 = vmatpush.msra.mxu0 0.0
        %2518 = vmatpush.msra.mxu0 0.0
        %2519 = vmatpush.msra.mxu0 0.0
        %2520 = vmatpush.msra.mxu0 0.0
        %2521 = vmatpush.msra.mxu0 0.0
        %2522 = vmatpush.msra.mxu0 0.0
        %2523 = vmatpush.msra.mxu0 0.0
        %2524 = vmatpush.msra.mxu0 0.0
        %2525 = vmatpush.msra.mxu0 0.0
        %2526 = vmatpush.msra.mxu0 0.0
        %2527 = vmatpush.msra.mxu0 0.0
        %2528 = vmatpush.msra.mxu0 0.0
        %2529 = vmatpush.msra.mxu0 0.0
        %2530 = vmatpush.msra.mxu0 %v2338
        %2531 = vmatmul.f32.gmra.mxu0 %v2420
        %v2532 = vpop.f32.mrf.mxu0
        %v2533 = vadd.f32 0.0, %v2532
        %2534 = vmatmul.f32.gmra.mxu0 %v2423
        %v2535 = vpop.f32.mrf.mxu0
        %v2536 = vadd.f32 0.0, %v2535
        %2537 = vmatmul.f32.gmra.mxu0 %v2426
        %v2538 = vpop.f32.mrf.mxu0
        %v2539 = vadd.f32 0.0, %v2538
        %2540 = vmatmul.f32.gmra.mxu0 %v2429
        %v2541 = vpop.f32.mrf.mxu0
        %v2542 = vadd.f32 0.0, %v2541
        %2543 = vmatmul.f32.gmra.mxu0 %v2432
        %v2544 = vpop.f32.mrf.mxu0
        %v2545 = vadd.f32 0.0, %v2544
        %2546 = vmatmul.f32.gmra.mxu0 %v2435
        %v2547 = vpop.f32.mrf.mxu0
        %v2548 = vadd.f32 0.0, %v2547
        %2549 = vmatmul.f32.gmra.mxu0 %v2438
        %v2550 = vpop.f32.mrf.mxu0
        %v2551 = vadd.f32 0.0, %v2550
        %2552 = vmatmul.f32.gmra.mxu0 %v2441
        %v2553 = vpop.f32.mrf.mxu0
        %v2554 = vadd.f32 0.0, %v2553
        %2555 = vmatmul.f32.gmra.mxu0 %v2444
        %v2556 = vpop.f32.mrf.mxu0
        %v2557 = vadd.f32 0.0, %v2556
        %2558 = vmatmul.f32.gmra.mxu0 %v2447
        %v2559 = vpop.f32.mrf.mxu0
        %v2560 = vadd.f32 0.0, %v2559
        %2561 = vmatmul.f32.gmra.mxu0 %v2450
        %v2562 = vpop.f32.mrf.mxu0
        %v2563 = vadd.f32 0.0, %v2562
        %2564 = vmatmul.f32.gmra.mxu0 %v2453
        %v2565 = vpop.f32.mrf.mxu0
        %v2566 = vadd.f32 0.0, %v2565
        %2567 = vmatmul.f32.gmra.mxu0 %v2456
        %v2568 = vpop.f32.mrf.mxu0
        %v2569 = vadd.f32 0.0, %v2568
        %2570 = vmatmul.f32.gmra.mxu0 %v2459
        %v2571 = vpop.f32.mrf.mxu0
        %v2572 = vadd.f32 0.0, %v2571
        %2573 = vmatmul.f32.gmra.mxu0 %v2462
        %v2574 = vpop.f32.mrf.mxu0
        %v2575 = vadd.f32 0.0, %v2574
        %2576 = vmatmul.f32.gmra.mxu0 %v2465
        %v2577 = vpop.f32.mrf.mxu0
        %v2578 = vadd.f32 0.0, %v2577
        %2579 = vmatmul.f32.gmra.mxu0 %v2468
        %v2580 = vpop.f32.mrf.mxu0
        %v2581 = vadd.f32 0.0, %v2580
        %2582 = vmatmul.f32.gmra.mxu0 %v2471
        %v2583 = vpop.f32.mrf.mxu0
        %v2584 = vadd.f32 0.0, %v2583
        %2585 = vmatmul.f32.gmra.mxu0 %v2474
        %v2586 = vpop.f32.mrf.mxu0
        %v2587 = vadd.f32 0.0, %v2586
        %2588 = vmatmul.f32.gmra.mxu0 %v2477
        %v2589 = vpop.f32.mrf.mxu0
        %v2590 = vadd.f32 0.0, %v2589
        %2591 = vmatmul.f32.gmra.mxu0 %v2480
        %v2592 = vpop.f32.mrf.mxu0
        %v2593 = vadd.f32 0.0, %v2592
        %2594 = vmatmul.f32.gmra.mxu0 %v2483
        %v2595 = vpop.f32.mrf.mxu0
        %v2596 = vadd.f32 0.0, %v2595
        %2597 = vmatmul.f32.gmra.mxu0 %v2486
        %v2598 = vpop.f32.mrf.mxu0
        %v2599 = vadd.f32 0.0, %v2598
        %2600 = vmatmul.f32.gmra.mxu0 %v2489
        %v2601 = vpop.f32.mrf.mxu0
        %v2602 = vadd.f32 0.0, %v2601
        %2603 = vmatmul.f32.gmra.mxu0 %v2492
        %v2604 = vpop.f32.mrf.mxu0
        %v2605 = vadd.f32 0.0, %v2604
        %2606 = vmatmul.f32.gmra.mxu0 %v2495
        %v2607 = vpop.f32.mrf.mxu0
        %v2608 = vadd.f32 0.0, %v2607
        %2609 = vmatmul.f32.gmra.mxu0 %v2498
        %v2610 = vpop.f32.mrf.mxu0
        %v2611 = vadd.f32 0.0, %v2610
        %2612 = vmatmul.f32.gmra.mxu0 %v2501
        %v2613 = vpop.f32.mrf.mxu0
        %v2614 = vadd.f32 0.0, %v2613
        %2615 = vmatmul.f32.gmra.mxu0 %v2504
        %v2616 = vpop.f32.mrf.mxu0
        %v2617 = vadd.f32 0.0, %v2616
        %2618 = vmatmul.f32.gmra.mxu0 %v2507
        %v2619 = vpop.f32.mrf.mxu0
        %v2620 = vadd.f32 0.0, %v2619
        %2621 = vmatmul.f32.gmra.mxu0 %v2510
        %v2622 = vpop.f32.mrf.mxu0
        %v2623 = vadd.f32 0.0, %v2622
        %2624 = vmatmul.f32.gmra.mxu0 %v2513
        %v2625 = vpop.f32.mrf.mxu0
        %v2626 = vadd.f32 0.0, %v2625
        %2627 = vdwg.mxu0
        %2628 = vmatpush.msra.mxu0 0.0
        %2629 = vmatpush.msra.mxu0 0.0
        %2630 = vmatpush.msra.mxu0 0.0
        %2631 = vmatpush.msra.mxu0 0.0
        %2632 = vmatpush.msra.mxu0 0.0
        %2633 = vmatpush.msra.mxu0 0.0
        %2634 = vmatpush.msra.mxu0 0.0
        %2635 = vmatpush.msra.mxu0 0.0
        %2636 = vmatpush.msra.mxu0 0.0
        %2637 = vmatpush.msra.mxu0 0.0
        %2638 = vmatpush.msra.mxu0 0.0
        %2639 = vmatpush.msra.mxu0 0.0
        %2640 = vmatpush.msra.mxu0 0.0
        %2641 = vmatpush.msra.mxu0 0.0
        %2642 = vmatpush.msra.mxu0 0.0
        %2643 = vmatpush.msra.mxu0 %v2353
        %2644 = vmatmul.f32.gmra.mxu0 %v2420
        %v2645 = vpop.f32.mrf.mxu0
        %v2646 = vadd.f32 0.0, %v2645
        %2647 = vmatmul.f32.gmra.mxu0 %v2423
        %v2648 = vpop.f32.mrf.mxu0
        %v2649 = vadd.f32 0.0, %v2648
        %2650 = vmatmul.f32.gmra.mxu0 %v2426
        %v2651 = vpop.f32.mrf.mxu0
        %v2652 = vadd.f32 0.0, %v2651
        %2653 = vmatmul.f32.gmra.mxu0 %v2429
        %v2654 = vpop.f32.mrf.mxu0
        %v2655 = vadd.f32 0.0, %v2654
        %2656 = vmatmul.f32.gmra.mxu0 %v2432
        %v2657 = vpop.f32.mrf.mxu0
        %v2658 = vadd.f32 0.0, %v2657
        %2659 = vmatmul.f32.gmra.mxu0 %v2435
        %v2660 = vpop.f32.mrf.mxu0
        %v2661 = vadd.f32 0.0, %v2660
        %2662 = vmatmul.f32.gmra.mxu0 %v2438
        %v2663 = vpop.f32.mrf.mxu0
        %v2664 = vadd.f32 0.0, %v2663
        %2665 = vmatmul.f32.gmra.mxu0 %v2441
        %v2666 = vpop.f32.mrf.mxu0
        %v2667 = vadd.f32 0.0, %v2666
        %2668 = vmatmul.f32.gmra.mxu0 %v2444
        %v2669 = vpop.f32.mrf.mxu0
        %v2670 = vadd.f32 0.0, %v2669
        %2671 = vmatmul.f32.gmra.mxu0 %v2447
        %v2672 = vpop.f32.mrf.mxu0
        %v2673 = vadd.f32 0.0, %v2672
        %2674 = vmatmul.f32.gmra.mxu0 %v2450
        %v2675 = vpop.f32.mrf.mxu0
        %v2676 = vadd.f32 0.0, %v2675
        %2677 = vmatmul.f32.gmra.mxu0 %v2453
        %v2678 = vpop.f32.mrf.mxu0
        %v2679 = vadd.f32 0.0, %v2678
        %2680 = vmatmul.f32.gmra.mxu0 %v2456
        %v2681 = vpop.f32.mrf.mxu0
        %v2682 = vadd.f32 0.0, %v2681
        %2683 = vmatmul.f32.gmra.mxu0 %v2459
        %v2684 = vpop.f32.mrf.mxu0
        %v2685 = vadd.f32 0.0, %v2684
        %2686 = vmatmul.f32.gmra.mxu0 %v2462
        %v2687 = vpop.f32.mrf.mxu0
        %v2688 = vadd.f32 0.0, %v2687
        %2689 = vmatmul.f32.gmra.mxu0 %v2465
        %v2690 = vpop.f32.mrf.mxu0
        %v2691 = vadd.f32 0.0, %v2690
        %2692 = vmatmul.f32.gmra.mxu0 %v2468
        %v2693 = vpop.f32.mrf.mxu0
        %v2694 = vadd.f32 0.0, %v2693
        %2695 = vmatmul.f32.gmra.mxu0 %v2471
        %v2696 = vpop.f32.mrf.mxu0
        %v2697 = vadd.f32 0.0, %v2696
        %2698 = vmatmul.f32.gmra.mxu0 %v2474
        %v2699 = vpop.f32.mrf.mxu0
        %v2700 = vadd.f32 0.0, %v2699
        %2701 = vmatmul.f32.gmra.mxu0 %v2477
        %v2702 = vpop.f32.mrf.mxu0
        %v2703 = vadd.f32 0.0, %v2702
        %2704 = vmatmul.f32.gmra.mxu0 %v2480
        %v2705 = vpop.f32.mrf.mxu0
        %v2706 = vadd.f32 0.0, %v2705
        %2707 = vmatmul.f32.gmra.mxu0 %v2483
        %v2708 = vpop.f32.mrf.mxu0
        %v2709 = vadd.f32 0.0, %v2708
        %2710 = vmatmul.f32.gmra.mxu0 %v2486
        %v2711 = vpop.f32.mrf.mxu0
        %v2712 = vadd.f32 0.0, %v2711
        %2713 = vmatmul.f32.gmra.mxu0 %v2489
        %v2714 = vpop.f32.mrf.mxu0
        %v2715 = vadd.f32 0.0, %v2714
        %2716 = vmatmul.f32.gmra.mxu0 %v2492
        %v2717 = vpop.f32.mrf.mxu0
        %v2718 = vadd.f32 0.0, %v2717
        %2719 = vmatmul.f32.gmra.mxu0 %v2495
        %v2720 = vpop.f32.mrf.mxu0
        %v2721 = vadd.f32 0.0, %v2720
        %2722 = vmatmul.f32.gmra.mxu0 %v2498
        %v2723 = vpop.f32.mrf.mxu0
        %v2724 = vadd.f32 0.0, %v2723
        %2725 = vmatmul.f32.gmra.mxu0 %v2501
        %v2726 = vpop.f32.mrf.mxu0
        %v2727 = vadd.f32 0.0, %v2726
        %2728 = vmatmul.f32.gmra.mxu0 %v2504
        %v2729 = vpop.f32.mrf.mxu0
        %v2730 = vadd.f32 0.0, %v2729
        %2731 = vmatmul.f32.gmra.mxu0 %v2507
        %v2732 = vpop.f32.mrf.mxu0
        %v2733 = vadd.f32 0.0, %v2732
        %2734 = vmatmul.f32.gmra.mxu0 %v2510
        %v2735 = vpop.f32.mrf.mxu0
        %v2736 = vadd.f32 0.0, %v2735
        %2737 = vmatmul.f32.gmra.mxu0 %v2513
        %v2738 = vpop.f32.mrf.mxu0
        %v2739 = vadd.f32 0.0, %v2738
        %2740 = vdwg.mxu0
        %2741 = vst [vmem:[%s334] sm:$0xff] %v2533
        %2742 = vst [vmem:[%s334 + $0x8] sm:$0xff] %v2646
        %2743 = vst [vmem:[%s334 + $0x10] sm:$0xff] %v2536
        %2744 = vst [vmem:[%s334 + $0x18] sm:$0xff] %v2649
        %2745 = vst [vmem:[%s334 + $0x20] sm:$0xff] %v2539
        %2746 = vst [vmem:[%s334 + $0x28] sm:$0xff] %v2652
        %2747 = vst [vmem:[%s334 + $0x30] sm:$0xff] %v2542
        %2748 = vst [vmem:[%s334 + $0x38] sm:$0xff] %v2655
        %2749 = vst [vmem:[%s334 + $0x40] sm:$0xff] %v2545
        %2750 = vst [vmem:[%s334 + $0x48] sm:$0xff] %v2658
        %2751 = vst [vmem:[%s334 + $0x50] sm:$0xff] %v2548
        %2752 = vst [vmem:[%s334 + $0x58] sm:$0xff] %v2661
        %2753 = vst [vmem:[%s334 + $0x60] sm:$0xff] %v2551
        %2754 = vst [vmem:[%s334 + $0x68] sm:$0xff] %v2664
        %2755 = vst [vmem:[%s334 + $0x70] sm:$0xff] %v2554
        %2756 = vst [vmem:[%s334 + $0x78] sm:$0xff] %v2667
        %2757 = vst [vmem:[%s334 + $0x80] sm:$0xff] %v2557
        %2758 = vst [vmem:[%s334 + $0x88] sm:$0xff] %v2670
        %2759 = vst [vmem:[%s334 + $0x90] sm:$0xff] %v2560
        %2760 = vst [vmem:[%s334 + $0x98] sm:$0xff] %v2673
        %2761 = vst [vmem:[%s334 + $0xa0] sm:$0xff] %v2563
        %2762 = vst [vmem:[%s334 + $0xa8] sm:$0xff] %v2676
        %2763 = vst [vmem:[%s334 + $0xb0] sm:$0xff] %v2566
        %2764 = vst [vmem:[%s334 + $0xb8] sm:$0xff] %v2679
        %2765 = vst [vmem:[%s334 + $0xc0] sm:$0xff] %v2569
        %2766 = vst [vmem:[%s334 + $0xc8] sm:$0xff] %v2682
        %2767 = vst [vmem:[%s334 + $0xd0] sm:$0xff] %v2572
        %2768 = vst [vmem:[%s334 + $0xd8] sm:$0xff] %v2685
        %2769 = vst [vmem:[%s334 + $0xe0] sm:$0xff] %v2575
        %2770 = vst [vmem:[%s334 + $0xe8] sm:$0xff] %v2688
        %2771 = vst [vmem:[%s334 + $0xf0] sm:$0xff] %v2578
        %2772 = vst [vmem:[%s334 + $0xf8] sm:$0xff] %v2691
        %2773 = vst [vmem:[%s334 + $0x100] sm:$0xff] %v2581
        %2774 = vst [vmem:[%s334 + $0x108] sm:$0xff] %v2694
        %2775 = vst [vmem:[%s334 + $0x110] sm:$0xff] %v2584
        %2776 = vst [vmem:[%s334 + $0x118] sm:$0xff] %v2697
        %2777 = vst [vmem:[%s334 + $0x120] sm:$0xff] %v2587
        %2778 = vst [vmem:[%s334 + $0x128] sm:$0xff] %v2700
        %2779 = vst [vmem:[%s334 + $0x130] sm:$0xff] %v2590
        %2780 = vst [vmem:[%s334 + $0x138] sm:$0xff] %v2703
        %2781 = vst [vmem:[%s334 + $0x140] sm:$0xff] %v2593
        %2782 = vst [vmem:[%s334 + $0x148] sm:$0xff] %v2706
        %2783 = vst [vmem:[%s334 + $0x150] sm:$0xff] %v2596
        %2784 = vst [vmem:[%s334 + $0x158] sm:$0xff] %v2709
        %2785 = vst [vmem:[%s334 + $0x160] sm:$0xff] %v2599
        %2786 = vst [vmem:[%s334 + $0x168] sm:$0xff] %v2712
        %2787 = vst [vmem:[%s334 + $0x170] sm:$0xff] %v2602
        %2788 = vst [vmem:[%s334 + $0x178] sm:$0xff] %v2715
        %2789 = vst [vmem:[%s334 + $0x180] sm:$0xff] %v2605
        %2790 = vst [vmem:[%s334 + $0x188] sm:$0xff] %v2718
        %2791 = vst [vmem:[%s334 + $0x190] sm:$0xff] %v2608
        %2792 = vst [vmem:[%s334 + $0x198] sm:$0xff] %v2721
        %2793 = vst [vmem:[%s334 + $0x1a0] sm:$0xff] %v2611
        %2794 = vst [vmem:[%s334 + $0x1a8] sm:$0xff] %v2724
        %2795 = vst [vmem:[%s334 + $0x1b0] sm:$0xff] %v2614
        %2796 = vst [vmem:[%s334 + $0x1b8] sm:$0xff] %v2727
        %2797 = vst [vmem:[%s334 + $0x1c0] sm:$0xff] %v2617
        %2798 = vst [vmem:[%s334 + $0x1c8] sm:$0xff] %v2730
        %2799 = vst [vmem:[%s334 + $0x1d0] sm:$0xff] %v2620
        %2800 = vst [vmem:[%s334 + $0x1d8] sm:$0xff] %v2733
        %2801 = vst [vmem:[%s334 + $0x1e0] sm:$0xff] %v2623
        %2802 = vst [vmem:[%s334 + $0x1e8] sm:$0xff] %v2736
        %2803 = vst [vmem:[%s334 + $0x1f0] sm:$0xff] %v2626
        %2804 = vst [vmem:[%s334 + $0x1f8] sm:$0xff] %v2739
        %s2805 = sand.u32 %s184, 1
        %s2806 = scalar_lea.sflag [#allocation4], %s2805
        %s2807 = sand.u32 %s184, 1
        %s2808 = smul.addr %s2807, 512
        %s2809 = scalar_lea.vmem [#allocation10], %s2808
        // Predicated region
        $region65: #{_lambda_.1} parent=47 // pred_check
          %p2810 = pneg %p194
        $region66: #{_lambda_.1} parent=47 // pred_check_branch
          %2812 = sbr.rel (%p2810) target = $region68
        $region67: #{_lambda_.1} parent=47 // pred_region
          %2814 = vsyncadd %s2806, 0
          %s2815 = smul.addr %s24, 64
          %s2816 = smul.addr %s2815, 8
          %s2817 = scalar_lea.hbm %s7, %s2816
          %s2818 = sshll.u32 %s2809, 4
          %s2819 = int_to_ptr.vmem [resolvable:$true] %s2818
          %s2820 = sshll.u32 %s2817, 4
          %s2821 = int_to_ptr.hbm [resolvable:$true] %s2820
          %2826 = dma.vmem_to_hbm [thread:$0]  %s2819, 8192, %s2821, %s2806, 256, 256, 16
        $region68: #{_lambda_.1} parent=47 // pred_fallthru
          _
      $region48: #{_lambda_.1} parent=5 // pred_fallthru
        _
      %p2827 = scmp.le.s32.totalorder 2, %s19
      // Predicated region
      $region69: #{_lambda_.1} parent=5 // pred_check
        %p2828 = pneg %p2827
      $region70: #{_lambda_.1} parent=5 // pred_check_branch
        %2830 = sbr.rel (%p2828) target = $region72
      $region71: #{_lambda_.1} parent=5 // pred_region
        %s2831 = ssub.s32 %s19, 2
        // Predicated region
        $region73: #{_lambda_.1} parent=71 // pred_check
          %p2832 = pneg %p200
        $region74: #{_lambda_.1} parent=71 // pred_check_branch
          %2834 = sbr.rel (%p2832) target = $region76
        $region75: #{_lambda_.1} parent=71 // pred_region
          %s2835 = sand.u32 %s185, 1
          %s2836 = scalar_lea.sflag [#allocation4], %s2835
          %s2837 = sand.u32 %s185, 1
          %s2838 = smul.addr %s2837, 512
          %s2839 = scalar_lea.vmem [#allocation10], %s2838
          %2841 = dma.done %s2836, 8192
        $region76: #{_lambda_.1} parent=71 // pred_fallthru
          _
      $region72: #{_lambda_.1} parent=5 // pred_fallthru
        _
    $region6: #{_lambda_.1} parent=1 // loop_footer
      %s23 = sadd.s32 1, %s19
    $region7: #{_lambda_.1} parent=1 // loop_footer_branch
      %18 = sbr.rel target = $region3
    $region8: #{_lambda_.1} parent=1 // loop_exit
      _
    %2842 = vsyncpa [#allocation3], 1
    %s2843 = scalar_lea.sflag [#allocation3], 1
    %2844 = vsyncpa %s2843, 1
    %2845 = vsyncpa [#allocation6], 1
    %2846 = vsyncpa [#allocation9], 1
    %2847 = vsyncpa [#allocation4], 1
    %s2848 = scalar_lea.sflag [#allocation4], 1
    %2849 = vsyncpa %s2848, 1

</llo_original>
